<compile_context>
chip_gen: v7x
topology: tpu7x:2x2x1
jax: 0.10.0
libtpu: 0.0.40
codegen_flags: <defaults>
</compile_context>

<pallas_src>
import jax
import jax.numpy as jnp
from jax.experimental import pallas as pl
from jax.experimental.pallas import tpu as pltpu

LANES = 128
_TINY_BYTES = 128 * 1024  # below this, plain (fused) jnp beats a pallas_call


def _h_swish_kernel(x_ref, o_ref):
    # Compute in f32 regardless of storage dtype (v5e has no bf16 VPU/EUP; the
    # casts are free VALU filler under the HBM roofline).
    x = x_ref[...].astype(jnp.float32)
    hs = jnp.clip(x + 3.0, 0.0, 6.0) * (1.0 / 6.0)  # h_sigmoid(x) = relu6(x+3)/6
    o_ref[...] = (x * hs).astype(o_ref.dtype)


def _h_swish_jnp(x):
    xf = x.astype(jnp.float32)
    y = xf * (jnp.clip(xf + 3.0, 0.0, 6.0) * (1.0 / 6.0))
    return y.astype(x.dtype)


def _sublane_multiple(dtype) -> int:
    itemsize = jnp.dtype(dtype).itemsize
    if itemsize >= 4:
        return 8
    if itemsize == 2:
        return 16
    return 32


def _round_up(x: int, m: int) -> int:
    return -(-x // m) * m


def _chip_config():
    """(num_tensorcores, target_block_bytes) — trace-time, best effort."""
    num_tc, target = 1, 2 * 1024 * 1024          # v5e / v6e: 1 TC, ~2 MiB blocks
    try:
        kind = jax.devices()[0].device_kind.lower()
        if "v7" in kind:
            num_tc, target = 2, 4 * 1024 * 1024  # v7x: 2 TCs, 3.2 TB/s -> bigger blocks
    except Exception:
        pass
    return num_tc, target


def _choose_tile_rows(rows: int, dtype, num_tc: int, target_bytes: int) -> int:
    itemsize = jnp.dtype(dtype).itemsize
    subl = _sublane_multiple(dtype)

    target_rows = max(subl, target_bytes // (LANES * itemsize))
    target_rows = _round_up(target_rows, subl)

    if rows <= target_rows:
        tile_r = rows            # single full-extent block (always layout-legal)
    else:
        tile_r = target_rows     # sublane-multiple block; partial last block OK

    # Megacore (v7x only): even step count so both TCs get equal work; only split
    # when each half carries at least ~2 MiB of traffic.
    slab_bytes = rows * LANES * itemsize
    if num_tc >= 2 and slab_bytes >= 4 * 1024 * 1024:
        steps = _round_up(max(pl.cdiv(rows, tile_r), 2), 2)
        cand = _round_up(-(-rows // steps), subl)
        if cand < rows:
            tile_r = cand
    return tile_r


def _run_2d(x2d: jax.Array, block_bytes=None) -> jax.Array:
    """Run the elementwise kernel on a (rows, 128) slab (any row count)."""
    rows, _ = x2d.shape
    dtype = x2d.dtype
    itemsize = jnp.dtype(dtype).itemsize

    num_tc, default_target = _chip_config()
    target_bytes = default_target if block_bytes is None else block_bytes
    tile_r = _choose_tile_rows(rows, dtype, num_tc, target_bytes)
    grid = (pl.cdiv(rows, tile_r),)

    total = rows * LANES
    cost = pl.CostEstimate(
        flops=5 * total,
        transcendentals=0,
        bytes_accessed=2 * total * itemsize,
    )

    return pl.pallas_call(
        _h_swish_kernel,
        out_shape=jax.ShapeDtypeStruct((rows, LANES), dtype),
        grid_spec=pltpu.PrefetchScalarGridSpec(
            num_scalar_prefetch=0,
            grid=grid,
            in_specs=[pl.BlockSpec((tile_r, LANES), lambda i: (i, 0))],
            out_specs=pl.BlockSpec((tile_r, LANES), lambda i: (i, 0)),
        ),
        compiler_params=pltpu.CompilerParams(
            dimension_semantics=("parallel",),
            vmem_limit_bytes=32 * 1024 * 1024,
        ),
        cost_estimate=cost,
    )(x2d)


def h_swish(x: jax.Array, *, block_bytes=None) -> jax.Array:
    """Elementwise h_swish matching PyTorch h_swish.forward (any shape).

    Floating dtypes go through the Pallas kernel (f32-internal compute); tiny or
    non-float inputs use a plain fused jnp expression with identical semantics.
    """
    orig_shape = x.shape
    total = x.size
    if total == 0:
        return x

    itemsize = jnp.dtype(x.dtype).itemsize
    if total * itemsize < _TINY_BYTES or not jnp.issubdtype(x.dtype, jnp.floating):
        # Tiny: pallas_call dispatch + pipeline prologue would dominate; let XLA fuse.
        return _h_swish_jnp(x)

    if total % LANES == 0:
        # Fast path: lane-dense (rows, 128) slab, no extra HBM passes.
        out2d = _run_2d(x.reshape(total // LANES, LANES), block_bytes)
        return out2d.reshape(orig_shape)

    # Ragged path: kernel on the 128-aligned prefix, plain jnp on the (<128-elem)
    # tail — avoids the old whole-array pad + slice (extra full HBM passes).
    prefix = (total // LANES) * LANES
    x_flat = x.reshape(-1)
    head = _run_2d(x_flat[:prefix].reshape(prefix // LANES, LANES), block_bytes)
    tail = _h_swish_jnp(x_flat[prefix:])
    return jnp.concatenate([head.reshape(-1), tail]).reshape(orig_shape)


def _ref(x):
    xf = x.astype(jnp.float32)
    return xf * (jnp.clip(xf + 3.0, 0.0, 6.0) / 6.0)


if __name__ == "__main__":
    key = jax.random.PRNGKey(0)

    # 1. Module-typical small NCHW activation (tiny-tensor fused fallback).
    x = jax.random.normal(key, (2, 4, 16, 16), dtype=jnp.float32) * 4.0
    y = jax.block_until_ready(h_swish(x))
    assert y.shape == x.shape and y.dtype == x.dtype
    assert jnp.allclose(y, _ref(x), atol=1e-6, rtol=1e-6)

    # 2. Larger f32 activation -> Pallas fast path (single or few blocks).
    x1 = jax.random.normal(jax.random.PRNGKey(1), (8, 32, 32, 32), dtype=jnp.float32) * 4.0
    y1 = jax.block_until_ready(h_swish(x1))
    assert y1.shape == x1.shape and y1.dtype == x1.dtype
    assert jnp.allclose(y1, _ref(x1), atol=1e-6, rtol=1e-6)

    # 3. Partial final row-block (rows=1030 not divisible by tile_r=128): exercises
    #    the blocked pipeline's masked last block via a small block_bytes override.
    x2 = jax.random.normal(jax.random.PRNGKey(2), (1030, 128), dtype=jnp.float32) * 4.0
    y2 = jax.block_until_ready(h_swish(x2, block_bytes=64 * 1024))
    assert y2.shape == x2.shape and y2.dtype == x2.dtype
    assert jnp.allclose(y2, _ref(x2), atol=1e-6, rtol=1e-6)

    # 4. bf16, total % 128 == 0 but NOT % 2048 == 0 (relaxed fast-path condition),
    #    rows=1001 not a multiple of 16 -> single full-extent block.
    xb = (jax.random.normal(jax.random.PRNGKey(3), (7, 11, 13, 128)) * 4.0).astype(jnp.bfloat16)
    yb = jax.block_until_ready(h_swish(xb))
    refb = _ref(xb).astype(jnp.bfloat16).astype(jnp.float32)
    assert yb.shape == xb.shape and yb.dtype == jnp.bfloat16
    assert jnp.allclose(yb.astype(jnp.float32), refb, atol=1e-2, rtol=1e-2)

    # 5. Ragged, non-tiny size -> kernel prefix + jnp tail (no whole-array pad/slice).
    x3 = jax.random.normal(jax.random.PRNGKey(4), (76837,), dtype=jnp.float32) * 4.0
    y3 = jax.block_until_ready(h_swish(x3))
    assert y3.shape == x3.shape and y3.dtype == x3.dtype
    assert jnp.allclose(y3, _ref(x3), atol=1e-6, rtol=1e-6)

    # 6. Ragged tiny size -> fused fallback.
    x4 = jax.random.normal(jax.random.PRNGKey(5), (3, 5, 7, 11), dtype=jnp.float32) * 4.0
    y4 = jax.block_until_ready(h_swish(x4))
    assert jnp.allclose(y4, _ref(x4), atol=1e-6, rtol=1e-6)

    print("KERNEL_OK")
</pallas_src>

<mosaic_0001>
module attributes {stable_mosaic.version = 11 : i64} {
  func.func @_h_swish_kernel(%arg0: i32, %arg1: memref<2048x128xf32, #tpu.memory_space<vmem>>, %arg2: memref<2048x128xf32, #tpu.memory_space<vmem>>) attributes {dimension_semantics = [#tpu.dimension_semantics<parallel>], iteration_bounds = array<i64: 1>, scalar_prefetch = 0 : i64, scratch_operands = 0 : i64, tpu.core_type = #tpu.core_type<tc>, window_params = [{transform_indices = @transform_0, window_bounds = array<i64: 2048, 128>}, {transform_indices = @transform_1, window_bounds = array<i64: 2048, 128>}]} {
    %c0 = arith.constant 0 : index
    %c0_0 = arith.constant 0 : index
    %0 = vector.load %arg1[%c0, %c0_0] : memref<2048x128xf32, #tpu.memory_space<vmem>>, vector<2048x128xf32>
    %cst = arith.constant 3.000000e+00 : f32
    %1 = vector.broadcast %cst : f32 to vector<2048x128xf32>
    %2 = arith.addf %0, %1 : vector<2048x128xf32>
    %cst_1 = arith.constant 0.000000e+00 : f32
    %cst_2 = arith.constant 6.000000e+00 : f32
    %3 = vector.broadcast %cst_1 : f32 to vector<2048x128xf32>
    %4 = arith.maximumf %3, %2 : vector<2048x128xf32>
    %5 = vector.broadcast %cst_2 : f32 to vector<2048x128xf32>
    %6 = arith.minimumf %5, %4 : vector<2048x128xf32>
    %cst_3 = arith.constant 0.166666672 : f32
    %7 = vector.broadcast %cst_3 : f32 to vector<2048x128xf32>
    %8 = arith.mulf %6, %7 : vector<2048x128xf32>
    %9 = arith.mulf %0, %8 : vector<2048x128xf32>
    %c0_4 = arith.constant 0 : index
    %c0_5 = arith.constant 0 : index
    %10 = vector.load %arg2[%c0_4, %c0_5] : memref<2048x128xf32, #tpu.memory_space<vmem>>, vector<2048x128xf32>
    tpu.vector_store %arg2[%c0_4, %c0_5], %9 {strides = array<i32>} : memref<2048x128xf32, #tpu.memory_space<vmem>>, vector<2048x128xf32>,
    return
  }
  func.func @transform_0(%arg0: i32) -> (i32, i32) {
    %c0_i32 = arith.constant 0 : i32
    %c0_i32_0 = arith.constant 0 : i32
    return %arg0, %c0_i32 : i32, i32
  }
  func.func @transform_1(%arg0: i32) -> (i32, i32) {
    %c0_i32 = arith.constant 0 : i32
    %c0_i32_0 = arith.constant 0 : i32
    return %arg0, %c0_i32 : i32, i32
  }
}

</mosaic_0001>

<llo_original>
// kernel: tpu_custom_call.1
$region0: #{tpu_custom_call.1}
  #allocation0 [shape = 'u32[]', space=smem, size = 0x4, offset = 0x4, fixed_abs, tag = 'smem constant byte address 0x4 - core index']
  #allocation1 [shape = 'u32[144,128]{1,0:T(1,128)}', space=vmem, size = 0x12000, scoped, tag = 'internal scratch']
  %s0 = inlined_call_operand.hbm [shape: f32[2048,128], index: 0, kind: input, shape index: {}]
  %s1 = inlined_call_operand.hbm [shape: f32[2048,128], index: 1, kind: output, shape index: {}]
  %s2 = sld [smem:[#allocation0]]
  $region18: #{tpu_custom_call.1} parent=0
    _
  %s4 = ssub.s32 1, %s2
  %s5 = scalar_select 0, %s4, %s2
  $region1: #{tpu_custom_call.1} parent=0
    #allocation2 [shape = 'u8[1048576]{0}', space=vmem, size = 0x100000, scoped, tag = 'input window, operand 0, single buffered']
    #allocation3 [shape = 's32[1]{0}', space=sflag, size = 0x4, scoped, tag = 'scoped memory for tpu_custom_call.1']
    #allocation4 [shape = 's32[1]{0}', space=sflag, size = 0x4, scoped, tag = 'scoped memory for tpu_custom_call.1']
    #allocation5 [shape = 'u8[1048576]{0}', space=vmem, size = 0x100000, scoped, tag = 'output window, operand 0, single buffered']
    %6 = vsyncpa [#allocation3], 0
    %7 = vsyncpa [#allocation4], 0
    // Predicated region
    $region2: #{tpu_custom_call.1} parent=1 // pred_check
      _
    $region3: #{tpu_custom_call.1} parent=1 // pred_check_branch
      %9 = sbr.rel (0) target = $region5
    $region4: #{tpu_custom_call.1} parent=1 // pred_region
      %s11 = ssub.s32 32768, 32768
      %12 = vsyncadd [#allocation3], %s11
      %s13 = sshll.u32 [#allocation2], 4
      %s14 = int_to_ptr.vmem [resolvable:$true] %s13
      %19 = dma.hbm_to_vmem [thread:$0]  %s0, 32768, %s14, [#allocation3], 128, 128, 8
    $region5: #{tpu_custom_call.1} parent=1 // pred_fallthru
      _
    // Predicated region
    $region6: #{tpu_custom_call.1} parent=1 // pred_check
      _
    $region7: #{tpu_custom_call.1} parent=1 // pred_check_branch
      %21 = sbr.rel (0) target = $region9
    $region8: #{tpu_custom_call.1} parent=1 // pred_region
      %22 = dma.done [#allocation3], 32768
    $region9: #{tpu_custom_call.1} parent=1 // pred_fallthru
      _
    %v23 = vld [vmem:[#allocation2] sm:$0xff]
    %v24 = vld [vmem:[#allocation2 + $0x8] sm:$0xff]
    %v25 = vld [vmem:[#allocation2 + $0x10] sm:$0xff]
    %v26 = vld [vmem:[#allocation2 + $0x18] sm:$0xff]
    %v27 = vld [vmem:[#allocation2 + $0x20] sm:$0xff]
    %v28 = vld [vmem:[#allocation2 + $0x28] sm:$0xff]
    %v29 = vld [vmem:[#allocation2 + $0x30] sm:$0xff]
    %v30 = vld [vmem:[#allocation2 + $0x38] sm:$0xff]
    %v31 = vld [vmem:[#allocation2 + $0x40] sm:$0xff]
    %v32 = vld [vmem:[#allocation2 + $0x48] sm:$0xff]
    %v33 = vld [vmem:[#allocation2 + $0x50] sm:$0xff]
    %v34 = vld [vmem:[#allocation2 + $0x58] sm:$0xff]
    %v35 = vld [vmem:[#allocation2 + $0x60] sm:$0xff]
    %v36 = vld [vmem:[#allocation2 + $0x68] sm:$0xff]
    %v37 = vld [vmem:[#allocation2 + $0x70] sm:$0xff]
    %v38 = vld [vmem:[#allocation2 + $0x78] sm:$0xff]
    %v39 = vld [vmem:[#allocation2 + $0x80] sm:$0xff]
    %v40 = vld [vmem:[#allocation2 + $0x88] sm:$0xff]
    %v41 = vld [vmem:[#allocation2 + $0x90] sm:$0xff]
    %v42 = vld [vmem:[#allocation2 + $0x98] sm:$0xff]
    %v43 = vld [vmem:[#allocation2 + $0xa0] sm:$0xff]
    %v44 = vld [vmem:[#allocation2 + $0xa8] sm:$0xff]
    %v45 = vld [vmem:[#allocation2 + $0xb0] sm:$0xff]
    %v46 = vld [vmem:[#allocation2 + $0xb8] sm:$0xff]
    %v47 = vld [vmem:[#allocation2 + $0xc0] sm:$0xff]
    %v48 = vld [vmem:[#allocation2 + $0xc8] sm:$0xff]
    %v49 = vld [vmem:[#allocation2 + $0xd0] sm:$0xff]
    %v50 = vld [vmem:[#allocation2 + $0xd8] sm:$0xff]
    %v51 = vld [vmem:[#allocation2 + $0xe0] sm:$0xff]
    %v52 = vld [vmem:[#allocation2 + $0xe8] sm:$0xff]
    %v53 = vld [vmem:[#allocation2 + $0xf0] sm:$0xff]
    %v54 = vld [vmem:[#allocation2 + $0xf8] sm:$0xff]
    %v55 = vld [vmem:[#allocation2 + $0x100] sm:$0xff]
    %v56 = vld [vmem:[#allocation2 + $0x108] sm:$0xff]
    %v57 = vld [vmem:[#allocation2 + $0x110] sm:$0xff]
    %v58 = vld [vmem:[#allocation2 + $0x118] sm:$0xff]
    %v59 = vld [vmem:[#allocation2 + $0x120] sm:$0xff]
    %v60 = vld [vmem:[#allocation2 + $0x128] sm:$0xff]
    %v61 = vld [vmem:[#allocation2 + $0x130] sm:$0xff]
    %v62 = vld [vmem:[#allocation2 + $0x138] sm:$0xff]
    %v63 = vld [vmem:[#allocation2 + $0x140] sm:$0xff]
    %v64 = vld [vmem:[#allocation2 + $0x148] sm:$0xff]
    %v65 = vld [vmem:[#allocation2 + $0x150] sm:$0xff]
    %v66 = vld [vmem:[#allocation2 + $0x158] sm:$0xff]
    %v67 = vld [vmem:[#allocation2 + $0x160] sm:$0xff]
    %v68 = vld [vmem:[#allocation2 + $0x168] sm:$0xff]
    %v69 = vld [vmem:[#allocation2 + $0x170] sm:$0xff]
    %v70 = vld [vmem:[#allocation2 + $0x178] sm:$0xff]
    %v71 = vld [vmem:[#allocation2 + $0x180] sm:$0xff]
    %v72 = vld [vmem:[#allocation2 + $0x188] sm:$0xff]
    %v73 = vld [vmem:[#allocation2 + $0x190] sm:$0xff]
    %v74 = vld [vmem:[#allocation2 + $0x198] sm:$0xff]
    %v75 = vld [vmem:[#allocation2 + $0x1a0] sm:$0xff]
    %v76 = vld [vmem:[#allocation2 + $0x1a8] sm:$0xff]
    %v77 = vld [vmem:[#allocation2 + $0x1b0] sm:$0xff]
    %v78 = vld [vmem:[#allocation2 + $0x1b8] sm:$0xff]
    %v79 = vld [vmem:[#allocation2 + $0x1c0] sm:$0xff]
    %v80 = vld [vmem:[#allocation2 + $0x1c8] sm:$0xff]
    %v81 = vld [vmem:[#allocation2 + $0x1d0] sm:$0xff]
    %v82 = vld [vmem:[#allocation2 + $0x1d8] sm:$0xff]
    %v83 = vld [vmem:[#allocation2 + $0x1e0] sm:$0xff]
    %v84 = vld [vmem:[#allocation2 + $0x1e8] sm:$0xff]
    %v85 = vld [vmem:[#allocation2 + $0x1f0] sm:$0xff]
    %v86 = vld [vmem:[#allocation2 + $0x1f8] sm:$0xff]
    %v87 = vld [vmem:[#allocation2 + $0x200] sm:$0xff]
    %v88 = vld [vmem:[#allocation2 + $0x208] sm:$0xff]
    %v89 = vld [vmem:[#allocation2 + $0x210] sm:$0xff]
    %v90 = vld [vmem:[#allocation2 + $0x218] sm:$0xff]
    %v91 = vld [vmem:[#allocation2 + $0x220] sm:$0xff]
    %v92 = vld [vmem:[#allocation2 + $0x228] sm:$0xff]
    %v93 = vld [vmem:[#allocation2 + $0x230] sm:$0xff]
    %v94 = vld [vmem:[#allocation2 + $0x238] sm:$0xff]
    %v95 = vld [vmem:[#allocation2 + $0x240] sm:$0xff]
    %v96 = vld [vmem:[#allocation2 + $0x248] sm:$0xff]
    %v97 = vld [vmem:[#allocation2 + $0x250] sm:$0xff]
    %v98 = vld [vmem:[#allocation2 + $0x258] sm:$0xff]
    %v99 = vld [vmem:[#allocation2 + $0x260] sm:$0xff]
    %v100 = vld [vmem:[#allocation2 + $0x268] sm:$0xff]
    %v101 = vld [vmem:[#allocation2 + $0x270] sm:$0xff]
    %v102 = vld [vmem:[#allocation2 + $0x278] sm:$0xff]
    %v103 = vld [vmem:[#allocation2 + $0x280] sm:$0xff]
    %v104 = vld [vmem:[#allocation2 + $0x288] sm:$0xff]
    %v105 = vld [vmem:[#allocation2 + $0x290] sm:$0xff]
    %v106 = vld [vmem:[#allocation2 + $0x298] sm:$0xff]
    %v107 = vld [vmem:[#allocation2 + $0x2a0] sm:$0xff]
    %v108 = vld [vmem:[#allocation2 + $0x2a8] sm:$0xff]
    %v109 = vld [vmem:[#allocation2 + $0x2b0] sm:$0xff]
    %v110 = vld [vmem:[#allocation2 + $0x2b8] sm:$0xff]
    %v111 = vld [vmem:[#allocation2 + $0x2c0] sm:$0xff]
    %v112 = vld [vmem:[#allocation2 + $0x2c8] sm:$0xff]
    %v113 = vld [vmem:[#allocation2 + $0x2d0] sm:$0xff]
    %v114 = vld [vmem:[#allocation2 + $0x2d8] sm:$0xff]
    %v115 = vld [vmem:[#allocation2 + $0x2e0] sm:$0xff]
    %v116 = vld [vmem:[#allocation2 + $0x2e8] sm:$0xff]
    %v117 = vld [vmem:[#allocation2 + $0x2f0] sm:$0xff]
    %v118 = vld [vmem:[#allocation2 + $0x2f8] sm:$0xff]
    %v119 = vld [vmem:[#allocation2 + $0x300] sm:$0xff]
    %v120 = vld [vmem:[#allocation2 + $0x308] sm:$0xff]
    %v121 = vld [vmem:[#allocation2 + $0x310] sm:$0xff]
    %v122 = vld [vmem:[#allocation2 + $0x318] sm:$0xff]
    %v123 = vld [vmem:[#allocation2 + $0x320] sm:$0xff]
    %v124 = vld [vmem:[#allocation2 + $0x328] sm:$0xff]
    %v125 = vld [vmem:[#allocation2 + $0x330] sm:$0xff]
    %v126 = vld [vmem:[#allocation2 + $0x338] sm:$0xff]
    %v127 = vld [vmem:[#allocation2 + $0x340] sm:$0xff]
    %v128 = vld [vmem:[#allocation2 + $0x348] sm:$0xff]
    %v129 = vld [vmem:[#allocation2 + $0x350] sm:$0xff]
    %v130 = vld [vmem:[#allocation2 + $0x358] sm:$0xff]
    %v131 = vld [vmem:[#allocation2 + $0x360] sm:$0xff]
    %v132 = vld [vmem:[#allocation2 + $0x368] sm:$0xff]
    %v133 = vld [vmem:[#allocation2 + $0x370] sm:$0xff]
    %v134 = vld [vmem:[#allocation2 + $0x378] sm:$0xff]
    %v135 = vld [vmem:[#allocation2 + $0x380] sm:$0xff]
    %v136 = vld [vmem:[#allocation2 + $0x388] sm:$0xff]
    %v137 = vld [vmem:[#allocation2 + $0x390] sm:$0xff]
    %v138 = vld [vmem:[#allocation2 + $0x398] sm:$0xff]
    %v139 = vld [vmem:[#allocation2 + $0x3a0] sm:$0xff]
    %v140 = vld [vmem:[#allocation2 + $0x3a8] sm:$0xff]
    %v141 = vld [vmem:[#allocation2 + $0x3b0] sm:$0xff]
    %v142 = vld [vmem:[#allocation2 + $0x3b8] sm:$0xff]
    %v143 = vld [vmem:[#allocation2 + $0x3c0] sm:$0xff]
    %v144 = vld [vmem:[#allocation2 + $0x3c8] sm:$0xff]
    %v145 = vld [vmem:[#allocation2 + $0x3d0] sm:$0xff]
    %v146 = vld [vmem:[#allocation2 + $0x3d8] sm:$0xff]
    %v147 = vld [vmem:[#allocation2 + $0x3e0] sm:$0xff]
    %v148 = vld [vmem:[#allocation2 + $0x3e8] sm:$0xff]
    %v149 = vld [vmem:[#allocation2 + $0x3f0] sm:$0xff]
    %v150 = vld [vmem:[#allocation2 + $0x3f8] sm:$0xff]
    %v151 = vld [vmem:[#allocation2 + $0x400] sm:$0xff]
    %v152 = vld [vmem:[#allocation2 + $0x408] sm:$0xff]
    %v153 = vld [vmem:[#allocation2 + $0x410] sm:$0xff]
    %v154 = vld [vmem:[#allocation2 + $0x418] sm:$0xff]
    %v155 = vld [vmem:[#allocation2 + $0x420] sm:$0xff]
    %v156 = vld [vmem:[#allocation2 + $0x428] sm:$0xff]
    %v157 = vld [vmem:[#allocation2 + $0x430] sm:$0xff]
    %v158 = vld [vmem:[#allocation2 + $0x438] sm:$0xff]
    %v159 = vld [vmem:[#allocation2 + $0x440] sm:$0xff]
    %v160 = vld [vmem:[#allocation2 + $0x448] sm:$0xff]
    %v161 = vld [vmem:[#allocation2 + $0x450] sm:$0xff]
    %v162 = vld [vmem:[#allocation2 + $0x458] sm:$0xff]
    %v163 = vld [vmem:[#allocation2 + $0x460] sm:$0xff]
    %v164 = vld [vmem:[#allocation2 + $0x468] sm:$0xff]
    %v165 = vld [vmem:[#allocation2 + $0x470] sm:$0xff]
    %v166 = vld [vmem:[#allocation2 + $0x478] sm:$0xff]
    %v167 = vld [vmem:[#allocation2 + $0x480] sm:$0xff]
    %v168 = vld [vmem:[#allocation2 + $0x488] sm:$0xff]
    %v169 = vld [vmem:[#allocation2 + $0x490] sm:$0xff]
    %v170 = vld [vmem:[#allocation2 + $0x498] sm:$0xff]
    %v171 = vld [vmem:[#allocation2 + $0x4a0] sm:$0xff]
    %v172 = vld [vmem:[#allocation2 + $0x4a8] sm:$0xff]
    %v173 = vld [vmem:[#allocation2 + $0x4b0] sm:$0xff]
    %v174 = vld [vmem:[#allocation2 + $0x4b8] sm:$0xff]
    %v175 = vld [vmem:[#allocation2 + $0x4c0] sm:$0xff]
    %v176 = vld [vmem:[#allocation2 + $0x4c8] sm:$0xff]
    %v177 = vld [vmem:[#allocation2 + $0x4d0] sm:$0xff]
    %v178 = vld [vmem:[#allocation2 + $0x4d8] sm:$0xff]
    %v179 = vld [vmem:[#allocation2 + $0x4e0] sm:$0xff]
    %v180 = vld [vmem:[#allocation2 + $0x4e8] sm:$0xff]
    %v181 = vld [vmem:[#allocation2 + $0x4f0] sm:$0xff]
    %v182 = vld [vmem:[#allocation2 + $0x4f8] sm:$0xff]
    %v183 = vld [vmem:[#allocation2 + $0x500] sm:$0xff]
    %v184 = vld [vmem:[#allocation2 + $0x508] sm:$0xff]
    %v185 = vld [vmem:[#allocation2 + $0x510] sm:$0xff]
    %v186 = vld [vmem:[#allocation2 + $0x518] sm:$0xff]
    %v187 = vld [vmem:[#allocation2 + $0x520] sm:$0xff]
    %v188 = vld [vmem:[#allocation2 + $0x528] sm:$0xff]
    %v189 = vld [vmem:[#allocation2 + $0x530] sm:$0xff]
    %v190 = vld [vmem:[#allocation2 + $0x538] sm:$0xff]
    %v191 = vld [vmem:[#allocation2 + $0x540] sm:$0xff]
    %v192 = vld [vmem:[#allocation2 + $0x548] sm:$0xff]
    %v193 = vld [vmem:[#allocation2 + $0x550] sm:$0xff]
    %v194 = vld [vmem:[#allocation2 + $0x558] sm:$0xff]
    %v195 = vld [vmem:[#allocation2 + $0x560] sm:$0xff]
    %v196 = vld [vmem:[#allocation2 + $0x568] sm:$0xff]
    %v197 = vld [vmem:[#allocation2 + $0x570] sm:$0xff]
    %v198 = vld [vmem:[#allocation2 + $0x578] sm:$0xff]
    %v199 = vld [vmem:[#allocation2 + $0x580] sm:$0xff]
    %v200 = vld [vmem:[#allocation2 + $0x588] sm:$0xff]
    %v201 = vld [vmem:[#allocation2 + $0x590] sm:$0xff]
    %v202 = vld [vmem:[#allocation2 + $0x598] sm:$0xff]
    %v203 = vld [vmem:[#allocation2 + $0x5a0] sm:$0xff]
    %v204 = vld [vmem:[#allocation2 + $0x5a8] sm:$0xff]
    %v205 = vld [vmem:[#allocation2 + $0x5b0] sm:$0xff]
    %v206 = vld [vmem:[#allocation2 + $0x5b8] sm:$0xff]
    %v207 = vld [vmem:[#allocation2 + $0x5c0] sm:$0xff]
    %v208 = vld [vmem:[#allocation2 + $0x5c8] sm:$0xff]
    %v209 = vld [vmem:[#allocation2 + $0x5d0] sm:$0xff]
    %v210 = vld [vmem:[#allocation2 + $0x5d8] sm:$0xff]
    %v211 = vld [vmem:[#allocation2 + $0x5e0] sm:$0xff]
    %v212 = vld [vmem:[#allocation2 + $0x5e8] sm:$0xff]
    %v213 = vld [vmem:[#allocation2 + $0x5f0] sm:$0xff]
    %v214 = vld [vmem:[#allocation2 + $0x5f8] sm:$0xff]
    %v215 = vld [vmem:[#allocation2 + $0x600] sm:$0xff]
    %v216 = vld [vmem:[#allocation2 + $0x608] sm:$0xff]
    %v217 = vld [vmem:[#allocation2 + $0x610] sm:$0xff]
    %v218 = vld [vmem:[#allocation2 + $0x618] sm:$0xff]
    %v219 = vld [vmem:[#allocation2 + $0x620] sm:$0xff]
    %v220 = vld [vmem:[#allocation2 + $0x628] sm:$0xff]
    %v221 = vld [vmem:[#allocation2 + $0x630] sm:$0xff]
    %v222 = vld [vmem:[#allocation2 + $0x638] sm:$0xff]
    %v223 = vld [vmem:[#allocation2 + $0x640] sm:$0xff]
    %v224 = vld [vmem:[#allocation2 + $0x648] sm:$0xff]
    %v225 = vld [vmem:[#allocation2 + $0x650] sm:$0xff]
    %v226 = vld [vmem:[#allocation2 + $0x658] sm:$0xff]
    %v227 = vld [vmem:[#allocation2 + $0x660] sm:$0xff]
    %v228 = vld [vmem:[#allocation2 + $0x668] sm:$0xff]
    %v229 = vld [vmem:[#allocation2 + $0x670] sm:$0xff]
    %v230 = vld [vmem:[#allocation2 + $0x678] sm:$0xff]
    %v231 = vld [vmem:[#allocation2 + $0x680] sm:$0xff]
    %v232 = vld [vmem:[#allocation2 + $0x688] sm:$0xff]
    %v233 = vld [vmem:[#allocation2 + $0x690] sm:$0xff]
    %v234 = vld [vmem:[#allocation2 + $0x698] sm:$0xff]
    %v235 = vld [vmem:[#allocation2 + $0x6a0] sm:$0xff]
    %v236 = vld [vmem:[#allocation2 + $0x6a8] sm:$0xff]
    %v237 = vld [vmem:[#allocation2 + $0x6b0] sm:$0xff]
    %v238 = vld [vmem:[#allocation2 + $0x6b8] sm:$0xff]
    %v239 = vld [vmem:[#allocation2 + $0x6c0] sm:$0xff]
    %v240 = vld [vmem:[#allocation2 + $0x6c8] sm:$0xff]
    %v241 = vld [vmem:[#allocation2 + $0x6d0] sm:$0xff]
    %v242 = vld [vmem:[#allocation2 + $0x6d8] sm:$0xff]
    %v243 = vld [vmem:[#allocation2 + $0x6e0] sm:$0xff]
    %v244 = vld [vmem:[#allocation2 + $0x6e8] sm:$0xff]
    %v245 = vld [vmem:[#allocation2 + $0x6f0] sm:$0xff]
    %v246 = vld [vmem:[#allocation2 + $0x6f8] sm:$0xff]
    %v247 = vld [vmem:[#allocation2 + $0x700] sm:$0xff]
    %v248 = vld [vmem:[#allocation2 + $0x708] sm:$0xff]
    %v249 = vld [vmem:[#allocation2 + $0x710] sm:$0xff]
    %v250 = vld [vmem:[#allocation2 + $0x718] sm:$0xff]
    %v251 = vld [vmem:[#allocation2 + $0x720] sm:$0xff]
    %v252 = vld [vmem:[#allocation2 + $0x728] sm:$0xff]
    %v253 = vld [vmem:[#allocation2 + $0x730] sm:$0xff]
    %v254 = vld [vmem:[#allocation2 + $0x738] sm:$0xff]
    %v255 = vld [vmem:[#allocation2 + $0x740] sm:$0xff]
    %v256 = vld [vmem:[#allocation2 + $0x748] sm:$0xff]
    %v257 = vld [vmem:[#allocation2 + $0x750] sm:$0xff]
    %v258 = vld [vmem:[#allocation2 + $0x758] sm:$0xff]
    %v259 = vld [vmem:[#allocation2 + $0x760] sm:$0xff]
    %v260 = vld [vmem:[#allocation2 + $0x768] sm:$0xff]
    %v261 = vld [vmem:[#allocation2 + $0x770] sm:$0xff]
    %v262 = vld [vmem:[#allocation2 + $0x778] sm:$0xff]
    %v263 = vld [vmem:[#allocation2 + $0x780] sm:$0xff]
    %v264 = vld [vmem:[#allocation2 + $0x788] sm:$0xff]
    %v265 = vld [vmem:[#allocation2 + $0x790] sm:$0xff]
    %v266 = vld [vmem:[#allocation2 + $0x798] sm:$0xff]
    %v267 = vld [vmem:[#allocation2 + $0x7a0] sm:$0xff]
    %v268 = vld [vmem:[#allocation2 + $0x7a8] sm:$0xff]
    %v269 = vld [vmem:[#allocation2 + $0x7b0] sm:$0xff]
    %v270 = vld [vmem:[#allocation2 + $0x7b8] sm:$0xff]
    %v271 = vld [vmem:[#allocation2 + $0x7c0] sm:$0xff]
    %v272 = vld [vmem:[#allocation2 + $0x7c8] sm:$0xff]
    %v273 = vld [vmem:[#allocation2 + $0x7d0] sm:$0xff]
    %v274 = vld [vmem:[#allocation2 + $0x7d8] sm:$0xff]
    %v275 = vld [vmem:[#allocation2 + $0x7e0] sm:$0xff]
    %v276 = vld [vmem:[#allocation2 + $0x7e8] sm:$0xff]
    %v277 = vld [vmem:[#allocation2 + $0x7f0] sm:$0xff]
    %v278 = vld [vmem:[#allocation2 + $0x7f8] sm:$0xff]
    %v279 = vadd.f32 %v23, 3.0
    %v280 = vadd.f32 %v24, 3.0
    %v281 = vadd.f32 %v25, 3.0
    %v282 = vadd.f32 %v26, 3.0
    %v283 = vadd.f32 %v27, 3.0
    %v284 = vadd.f32 %v28, 3.0
    %v285 = vadd.f32 %v29, 3.0
    %v286 = vadd.f32 %v30, 3.0
    %v287 = vadd.f32 %v31, 3.0
    %v288 = vadd.f32 %v32, 3.0
    %v289 = vadd.f32 %v33, 3.0
    %v290 = vadd.f32 %v34, 3.0
    %v291 = vadd.f32 %v35, 3.0
    %v292 = vadd.f32 %v36, 3.0
    %v293 = vadd.f32 %v37, 3.0
    %v294 = vadd.f32 %v38, 3.0
    %v295 = vadd.f32 %v39, 3.0
    %v296 = vadd.f32 %v40, 3.0
    %v297 = vadd.f32 %v41, 3.0
    %v298 = vadd.f32 %v42, 3.0
    %v299 = vadd.f32 %v43, 3.0
    %v300 = vadd.f32 %v44, 3.0
    %v301 = vadd.f32 %v45, 3.0
    %v302 = vadd.f32 %v46, 3.0
    %v303 = vadd.f32 %v47, 3.0
    %v304 = vadd.f32 %v48, 3.0
    %v305 = vadd.f32 %v49, 3.0
    %v306 = vadd.f32 %v50, 3.0
    %v307 = vadd.f32 %v51, 3.0
    %v308 = vadd.f32 %v52, 3.0
    %v309 = vadd.f32 %v53, 3.0
    %v310 = vadd.f32 %v54, 3.0
    %v311 = vadd.f32 %v55, 3.0
    %v312 = vadd.f32 %v56, 3.0
    %v313 = vadd.f32 %v57, 3.0
    %v314 = vadd.f32 %v58, 3.0
    %v315 = vadd.f32 %v59, 3.0
    %v316 = vadd.f32 %v60, 3.0
    %v317 = vadd.f32 %v61, 3.0
    %v318 = vadd.f32 %v62, 3.0
    %v319 = vadd.f32 %v63, 3.0
    %v320 = vadd.f32 %v64, 3.0
    %v321 = vadd.f32 %v65, 3.0
    %v322 = vadd.f32 %v66, 3.0
    %v323 = vadd.f32 %v67, 3.0
    %v324 = vadd.f32 %v68, 3.0
    %v325 = vadd.f32 %v69, 3.0
    %v326 = vadd.f32 %v70, 3.0
    %v327 = vadd.f32 %v71, 3.0
    %v328 = vadd.f32 %v72, 3.0
    %v329 = vadd.f32 %v73, 3.0
    %v330 = vadd.f32 %v74, 3.0
    %v331 = vadd.f32 %v75, 3.0
    %v332 = vadd.f32 %v76, 3.0
    %v333 = vadd.f32 %v77, 3.0
    %v334 = vadd.f32 %v78, 3.0
    %v335 = vadd.f32 %v79, 3.0
    %v336 = vadd.f32 %v80, 3.0
    %v337 = vadd.f32 %v81, 3.0
    %v338 = vadd.f32 %v82, 3.0
    %v339 = vadd.f32 %v83, 3.0
    %v340 = vadd.f32 %v84, 3.0
    %v341 = vadd.f32 %v85, 3.0
    %v342 = vadd.f32 %v86, 3.0
    %v343 = vadd.f32 %v87, 3.0
    %v344 = vadd.f32 %v88, 3.0
    %v345 = vadd.f32 %v89, 3.0
    %v346 = vadd.f32 %v90, 3.0
    %v347 = vadd.f32 %v91, 3.0
    %v348 = vadd.f32 %v92, 3.0
    %v349 = vadd.f32 %v93, 3.0
    %v350 = vadd.f32 %v94, 3.0
    %v351 = vadd.f32 %v95, 3.0
    %v352 = vadd.f32 %v96, 3.0
    %v353 = vadd.f32 %v97, 3.0
    %v354 = vadd.f32 %v98, 3.0
    %v355 = vadd.f32 %v99, 3.0
    %v356 = vadd.f32 %v100, 3.0
    %v357 = vadd.f32 %v101, 3.0
    %v358 = vadd.f32 %v102, 3.0
    %v359 = vadd.f32 %v103, 3.0
    %v360 = vadd.f32 %v104, 3.0
    %v361 = vadd.f32 %v105, 3.0
    %v362 = vadd.f32 %v106, 3.0
    %v363 = vadd.f32 %v107, 3.0
    %v364 = vadd.f32 %v108, 3.0
    %v365 = vadd.f32 %v109, 3.0
    %v366 = vadd.f32 %v110, 3.0
    %v367 = vadd.f32 %v111, 3.0
    %v368 = vadd.f32 %v112, 3.0
    %v369 = vadd.f32 %v113, 3.0
    %v370 = vadd.f32 %v114, 3.0
    %v371 = vadd.f32 %v115, 3.0
    %v372 = vadd.f32 %v116, 3.0
    %v373 = vadd.f32 %v117, 3.0
    %v374 = vadd.f32 %v118, 3.0
    %v375 = vadd.f32 %v119, 3.0
    %v376 = vadd.f32 %v120, 3.0
    %v377 = vadd.f32 %v121, 3.0
    %v378 = vadd.f32 %v122, 3.0
    %v379 = vadd.f32 %v123, 3.0
    %v380 = vadd.f32 %v124, 3.0
    %v381 = vadd.f32 %v125, 3.0
    %v382 = vadd.f32 %v126, 3.0
    %v383 = vadd.f32 %v127, 3.0
    %v384 = vadd.f32 %v128, 3.0
    %v385 = vadd.f32 %v129, 3.0
    %v386 = vadd.f32 %v130, 3.0
    %v387 = vadd.f32 %v131, 3.0
    %v388 = vadd.f32 %v132, 3.0
    %v389 = vadd.f32 %v133, 3.0
    %v390 = vadd.f32 %v134, 3.0
    %v391 = vadd.f32 %v135, 3.0
    %v392 = vadd.f32 %v136, 3.0
    %v393 = vadd.f32 %v137, 3.0
    %v394 = vadd.f32 %v138, 3.0
    %v395 = vadd.f32 %v139, 3.0
    %v396 = vadd.f32 %v140, 3.0
    %v397 = vadd.f32 %v141, 3.0
    %v398 = vadd.f32 %v142, 3.0
    %v399 = vadd.f32 %v143, 3.0
    %v400 = vadd.f32 %v144, 3.0
    %v401 = vadd.f32 %v145, 3.0
    %v402 = vadd.f32 %v146, 3.0
    %v403 = vadd.f32 %v147, 3.0
    %v404 = vadd.f32 %v148, 3.0
    %v405 = vadd.f32 %v149, 3.0
    %v406 = vadd.f32 %v150, 3.0
    %v407 = vadd.f32 %v151, 3.0
    %v408 = vadd.f32 %v152, 3.0
    %v409 = vadd.f32 %v153, 3.0
    %v410 = vadd.f32 %v154, 3.0
    %v411 = vadd.f32 %v155, 3.0
    %v412 = vadd.f32 %v156, 3.0
    %v413 = vadd.f32 %v157, 3.0
    %v414 = vadd.f32 %v158, 3.0
    %v415 = vadd.f32 %v159, 3.0
    %v416 = vadd.f32 %v160, 3.0
    %v417 = vadd.f32 %v161, 3.0
    %v418 = vadd.f32 %v162, 3.0
    %v419 = vadd.f32 %v163, 3.0
    %v420 = vadd.f32 %v164, 3.0
    %v421 = vadd.f32 %v165, 3.0
    %v422 = vadd.f32 %v166, 3.0
    %v423 = vadd.f32 %v167, 3.0
    %v424 = vadd.f32 %v168, 3.0
    %v425 = vadd.f32 %v169, 3.0
    %v426 = vadd.f32 %v170, 3.0
    %v427 = vadd.f32 %v171, 3.0
    %v428 = vadd.f32 %v172, 3.0
    %v429 = vadd.f32 %v173, 3.0
    %v430 = vadd.f32 %v174, 3.0
    %v431 = vadd.f32 %v175, 3.0
    %v432 = vadd.f32 %v176, 3.0
    %v433 = vadd.f32 %v177, 3.0
    %v434 = vadd.f32 %v178, 3.0
    %v435 = vadd.f32 %v179, 3.0
    %v436 = vadd.f32 %v180, 3.0
    %v437 = vadd.f32 %v181, 3.0
    %v438 = vadd.f32 %v182, 3.0
    %v439 = vadd.f32 %v183, 3.0
    %v440 = vadd.f32 %v184, 3.0
    %v441 = vadd.f32 %v185, 3.0
    %v442 = vadd.f32 %v186, 3.0
    %v443 = vadd.f32 %v187, 3.0
    %v444 = vadd.f32 %v188, 3.0
    %v445 = vadd.f32 %v189, 3.0
    %v446 = vadd.f32 %v190, 3.0
    %v447 = vadd.f32 %v191, 3.0
    %v448 = vadd.f32 %v192, 3.0
    %v449 = vadd.f32 %v193, 3.0
    %v450 = vadd.f32 %v194, 3.0
    %v451 = vadd.f32 %v195, 3.0
    %v452 = vadd.f32 %v196, 3.0
    %v453 = vadd.f32 %v197, 3.0
    %v454 = vadd.f32 %v198, 3.0
    %v455 = vadd.f32 %v199, 3.0
    %v456 = vadd.f32 %v200, 3.0
    %v457 = vadd.f32 %v201, 3.0
    %v458 = vadd.f32 %v202, 3.0
    %v459 = vadd.f32 %v203, 3.0
    %v460 = vadd.f32 %v204, 3.0
    %v461 = vadd.f32 %v205, 3.0
    %v462 = vadd.f32 %v206, 3.0
    %v463 = vadd.f32 %v207, 3.0
    %v464 = vadd.f32 %v208, 3.0
    %v465 = vadd.f32 %v209, 3.0
    %v466 = vadd.f32 %v210, 3.0
    %v467 = vadd.f32 %v211, 3.0
    %v468 = vadd.f32 %v212, 3.0
    %v469 = vadd.f32 %v213, 3.0
    %v470 = vadd.f32 %v214, 3.0
    %v471 = vadd.f32 %v215, 3.0
    %v472 = vadd.f32 %v216, 3.0
    %v473 = vadd.f32 %v217, 3.0
    %v474 = vadd.f32 %v218, 3.0
    %v475 = vadd.f32 %v219, 3.0
    %v476 = vadd.f32 %v220, 3.0
    %v477 = vadd.f32 %v221, 3.0
    %v478 = vadd.f32 %v222, 3.0
    %v479 = vadd.f32 %v223, 3.0
    %v480 = vadd.f32 %v224, 3.0
    %v481 = vadd.f32 %v225, 3.0
    %v482 = vadd.f32 %v226, 3.0
    %v483 = vadd.f32 %v227, 3.0
    %v484 = vadd.f32 %v228, 3.0
    %v485 = vadd.f32 %v229, 3.0
    %v486 = vadd.f32 %v230, 3.0
    %v487 = vadd.f32 %v231, 3.0
    %v488 = vadd.f32 %v232, 3.0
    %v489 = vadd.f32 %v233, 3.0
    %v490 = vadd.f32 %v234, 3.0
    %v491 = vadd.f32 %v235, 3.0
    %v492 = vadd.f32 %v236, 3.0
    %v493 = vadd.f32 %v237, 3.0
    %v494 = vadd.f32 %v238, 3.0
    %v495 = vadd.f32 %v239, 3.0
    %v496 = vadd.f32 %v240, 3.0
    %v497 = vadd.f32 %v241, 3.0
    %v498 = vadd.f32 %v242, 3.0
    %v499 = vadd.f32 %v243, 3.0
    %v500 = vadd.f32 %v244, 3.0
    %v501 = vadd.f32 %v245, 3.0
    %v502 = vadd.f32 %v246, 3.0
    %v503 = vadd.f32 %v247, 3.0
    %v504 = vadd.f32 %v248, 3.0
    %v505 = vadd.f32 %v249, 3.0
    %v506 = vadd.f32 %v250, 3.0
    %v507 = vadd.f32 %v251, 3.0
    %v508 = vadd.f32 %v252, 3.0
    %v509 = vadd.f32 %v253, 3.0
    %v510 = vadd.f32 %v254, 3.0
    %v511 = vadd.f32 %v255, 3.0
    %v512 = vadd.f32 %v256, 3.0
    %v513 = vadd.f32 %v257, 3.0
    %v514 = vadd.f32 %v258, 3.0
    %v515 = vadd.f32 %v259, 3.0
    %v516 = vadd.f32 %v260, 3.0
    %v517 = vadd.f32 %v261, 3.0
    %v518 = vadd.f32 %v262, 3.0
    %v519 = vadd.f32 %v263, 3.0
    %v520 = vadd.f32 %v264, 3.0
    %v521 = vadd.f32 %v265, 3.0
    %v522 = vadd.f32 %v266, 3.0
    %v523 = vadd.f32 %v267, 3.0
    %v524 = vadd.f32 %v268, 3.0
    %v525 = vadd.f32 %v269, 3.0
    %v526 = vadd.f32 %v270, 3.0
    %v527 = vadd.f32 %v271, 3.0
    %v528 = vadd.f32 %v272, 3.0
    %v529 = vadd.f32 %v273, 3.0
    %v530 = vadd.f32 %v274, 3.0
    %v531 = vadd.f32 %v275, 3.0
    %v532 = vadd.f32 %v276, 3.0
    %v533 = vadd.f32 %v277, 3.0
    %v534 = vadd.f32 %v278, 3.0
    %v535 = vmax.f32 %v279, 0.0
    %v536 = vmax.f32 %v280, 0.0
    %v537 = vmax.f32 %v281, 0.0
    %v538 = vmax.f32 %v282, 0.0
    %v539 = vmax.f32 %v283, 0.0
    %v540 = vmax.f32 %v284, 0.0
    %v541 = vmax.f32 %v285, 0.0
    %v542 = vmax.f32 %v286, 0.0
    %v543 = vmax.f32 %v287, 0.0
    %v544 = vmax.f32 %v288, 0.0
    %v545 = vmax.f32 %v289, 0.0
    %v546 = vmax.f32 %v290, 0.0
    %v547 = vmax.f32 %v291, 0.0
    %v548 = vmax.f32 %v292, 0.0
    %v549 = vmax.f32 %v293, 0.0
    %v550 = vmax.f32 %v294, 0.0
    %v551 = vmax.f32 %v295, 0.0
    %v552 = vmax.f32 %v296, 0.0
    %v553 = vmax.f32 %v297, 0.0
    %v554 = vmax.f32 %v298, 0.0
    %v555 = vmax.f32 %v299, 0.0
    %v556 = vmax.f32 %v300, 0.0
    %v557 = vmax.f32 %v301, 0.0
    %v558 = vmax.f32 %v302, 0.0
    %v559 = vmax.f32 %v303, 0.0
    %v560 = vmax.f32 %v304, 0.0
    %v561 = vmax.f32 %v305, 0.0
    %v562 = vmax.f32 %v306, 0.0
    %v563 = vmax.f32 %v307, 0.0
    %v564 = vmax.f32 %v308, 0.0
    %v565 = vmax.f32 %v309, 0.0
    %v566 = vmax.f32 %v310, 0.0
    %v567 = vmax.f32 %v311, 0.0
    %v568 = vmax.f32 %v312, 0.0
    %v569 = vmax.f32 %v313, 0.0
    %v570 = vmax.f32 %v314, 0.0
    %v571 = vmax.f32 %v315, 0.0
    %v572 = vmax.f32 %v316, 0.0
    %v573 = vmax.f32 %v317, 0.0
    %v574 = vmax.f32 %v318, 0.0
    %v575 = vmax.f32 %v319, 0.0
    %v576 = vmax.f32 %v320, 0.0
    %v577 = vmax.f32 %v321, 0.0
    %v578 = vmax.f32 %v322, 0.0
    %v579 = vmax.f32 %v323, 0.0
    %v580 = vmax.f32 %v324, 0.0
    %v581 = vmax.f32 %v325, 0.0
    %v582 = vmax.f32 %v326, 0.0
    %v583 = vmax.f32 %v327, 0.0
    %v584 = vmax.f32 %v328, 0.0
    %v585 = vmax.f32 %v329, 0.0
    %v586 = vmax.f32 %v330, 0.0
    %v587 = vmax.f32 %v331, 0.0
    %v588 = vmax.f32 %v332, 0.0
    %v589 = vmax.f32 %v333, 0.0
    %v590 = vmax.f32 %v334, 0.0
    %v591 = vmax.f32 %v335, 0.0
    %v592 = vmax.f32 %v336, 0.0
    %v593 = vmax.f32 %v337, 0.0
    %v594 = vmax.f32 %v338, 0.0
    %v595 = vmax.f32 %v339, 0.0
    %v596 = vmax.f32 %v340, 0.0
    %v597 = vmax.f32 %v341, 0.0
    %v598 = vmax.f32 %v342, 0.0
    %v599 = vmax.f32 %v343, 0.0
    %v600 = vmax.f32 %v344, 0.0
    %v601 = vmax.f32 %v345, 0.0
    %v602 = vmax.f32 %v346, 0.0
    %v603 = vmax.f32 %v347, 0.0
    %v604 = vmax.f32 %v348, 0.0
    %v605 = vmax.f32 %v349, 0.0
    %v606 = vmax.f32 %v350, 0.0
    %v607 = vmax.f32 %v351, 0.0
    %v608 = vmax.f32 %v352, 0.0
    %v609 = vmax.f32 %v353, 0.0
    %v610 = vmax.f32 %v354, 0.0
    %v611 = vmax.f32 %v355, 0.0
    %v612 = vmax.f32 %v356, 0.0
    %v613 = vmax.f32 %v357, 0.0
    %v614 = vmax.f32 %v358, 0.0
    %v615 = vmax.f32 %v359, 0.0
    %v616 = vmax.f32 %v360, 0.0
    %v617 = vmax.f32 %v361, 0.0
    %v618 = vmax.f32 %v362, 0.0
    %v619 = vmax.f32 %v363, 0.0
    %v620 = vmax.f32 %v364, 0.0
    %v621 = vmax.f32 %v365, 0.0
    %v622 = vmax.f32 %v366, 0.0
    %v623 = vmax.f32 %v367, 0.0
    %v624 = vmax.f32 %v368, 0.0
    %v625 = vmax.f32 %v369, 0.0
    %v626 = vmax.f32 %v370, 0.0
    %v627 = vmax.f32 %v371, 0.0
    %v628 = vmax.f32 %v372, 0.0
    %v629 = vmax.f32 %v373, 0.0
    %v630 = vmax.f32 %v374, 0.0
    %v631 = vmax.f32 %v375, 0.0
    %v632 = vmax.f32 %v376, 0.0
    %v633 = vmax.f32 %v377, 0.0
    %v634 = vmax.f32 %v378, 0.0
    %v635 = vmax.f32 %v379, 0.0
    %v636 = vmax.f32 %v380, 0.0
    %v637 = vmax.f32 %v381, 0.0
    %v638 = vmax.f32 %v382, 0.0
    %v639 = vmax.f32 %v383, 0.0
    %v640 = vmax.f32 %v384, 0.0
    %v641 = vmax.f32 %v385, 0.0
    %v642 = vmax.f32 %v386, 0.0
    %v643 = vmax.f32 %v387, 0.0
    %v644 = vmax.f32 %v388, 0.0
    %v645 = vmax.f32 %v389, 0.0
    %v646 = vmax.f32 %v390, 0.0
    %v647 = vmax.f32 %v391, 0.0
    %v648 = vmax.f32 %v392, 0.0
    %v649 = vmax.f32 %v393, 0.0
    %v650 = vmax.f32 %v394, 0.0
    %v651 = vmax.f32 %v395, 0.0
    %v652 = vmax.f32 %v396, 0.0
    %v653 = vmax.f32 %v397, 0.0
    %v654 = vmax.f32 %v398, 0.0
    %v655 = vmax.f32 %v399, 0.0
    %v656 = vmax.f32 %v400, 0.0
    %v657 = vmax.f32 %v401, 0.0
    %v658 = vmax.f32 %v402, 0.0
    %v659 = vmax.f32 %v403, 0.0
    %v660 = vmax.f32 %v404, 0.0
    %v661 = vmax.f32 %v405, 0.0
    %v662 = vmax.f32 %v406, 0.0
    %v663 = vmax.f32 %v407, 0.0
    %v664 = vmax.f32 %v408, 0.0
    %v665 = vmax.f32 %v409, 0.0
    %v666 = vmax.f32 %v410, 0.0
    %v667 = vmax.f32 %v411, 0.0
    %v668 = vmax.f32 %v412, 0.0
    %v669 = vmax.f32 %v413, 0.0
    %v670 = vmax.f32 %v414, 0.0
    %v671 = vmax.f32 %v415, 0.0
    %v672 = vmax.f32 %v416, 0.0
    %v673 = vmax.f32 %v417, 0.0
    %v674 = vmax.f32 %v418, 0.0
    %v675 = vmax.f32 %v419, 0.0
    %v676 = vmax.f32 %v420, 0.0
    %v677 = vmax.f32 %v421, 0.0
    %v678 = vmax.f32 %v422, 0.0
    %v679 = vmax.f32 %v423, 0.0
    %v680 = vmax.f32 %v424, 0.0
    %v681 = vmax.f32 %v425, 0.0
    %v682 = vmax.f32 %v426, 0.0
    %v683 = vmax.f32 %v427, 0.0
    %v684 = vmax.f32 %v428, 0.0
    %v685 = vmax.f32 %v429, 0.0
    %v686 = vmax.f32 %v430, 0.0
    %v687 = vmax.f32 %v431, 0.0
    %v688 = vmax.f32 %v432, 0.0
    %v689 = vmax.f32 %v433, 0.0
    %v690 = vmax.f32 %v434, 0.0
    %v691 = vmax.f32 %v435, 0.0
    %v692 = vmax.f32 %v436, 0.0
    %v693 = vmax.f32 %v437, 0.0
    %v694 = vmax.f32 %v438, 0.0
    %v695 = vmax.f32 %v439, 0.0
    %v696 = vmax.f32 %v440, 0.0
    %v697 = vmax.f32 %v441, 0.0
    %v698 = vmax.f32 %v442, 0.0
    %v699 = vmax.f32 %v443, 0.0
    %v700 = vmax.f32 %v444, 0.0
    %v701 = vmax.f32 %v445, 0.0
    %v702 = vmax.f32 %v446, 0.0
    %v703 = vmax.f32 %v447, 0.0
    %v704 = vmax.f32 %v448, 0.0
    %v705 = vmax.f32 %v449, 0.0
    %v706 = vmax.f32 %v450, 0.0
    %v707 = vmax.f32 %v451, 0.0
    %v708 = vmax.f32 %v452, 0.0
    %v709 = vmax.f32 %v453, 0.0
    %v710 = vmax.f32 %v454, 0.0
    %v711 = vmax.f32 %v455, 0.0
    %v712 = vmax.f32 %v456, 0.0
    %v713 = vmax.f32 %v457, 0.0
    %v714 = vmax.f32 %v458, 0.0
    %v715 = vmax.f32 %v459, 0.0
    %v716 = vmax.f32 %v460, 0.0
    %v717 = vmax.f32 %v461, 0.0
    %v718 = vmax.f32 %v462, 0.0
    %v719 = vmax.f32 %v463, 0.0
    %v720 = vmax.f32 %v464, 0.0
    %v721 = vmax.f32 %v465, 0.0
    %v722 = vmax.f32 %v466, 0.0
    %v723 = vmax.f32 %v467, 0.0
    %v724 = vmax.f32 %v468, 0.0
    %v725 = vmax.f32 %v469, 0.0
    %v726 = vmax.f32 %v470, 0.0
    %v727 = vmax.f32 %v471, 0.0
    %v728 = vmax.f32 %v472, 0.0
    %v729 = vmax.f32 %v473, 0.0
    %v730 = vmax.f32 %v474, 0.0
    %v731 = vmax.f32 %v475, 0.0
    %v732 = vmax.f32 %v476, 0.0
    %v733 = vmax.f32 %v477, 0.0
    %v734 = vmax.f32 %v478, 0.0
    %v735 = vmax.f32 %v479, 0.0
    %v736 = vmax.f32 %v480, 0.0
    %v737 = vmax.f32 %v481, 0.0
    %v738 = vmax.f32 %v482, 0.0
    %v739 = vmax.f32 %v483, 0.0
    %v740 = vmax.f32 %v484, 0.0
    %v741 = vmax.f32 %v485, 0.0
    %v742 = vmax.f32 %v486, 0.0
    %v743 = vmax.f32 %v487, 0.0
    %v744 = vmax.f32 %v488, 0.0
    %v745 = vmax.f32 %v489, 0.0
    %v746 = vmax.f32 %v490, 0.0
    %v747 = vmax.f32 %v491, 0.0
    %v748 = vmax.f32 %v492, 0.0
    %v749 = vmax.f32 %v493, 0.0
    %v750 = vmax.f32 %v494, 0.0
    %v751 = vmax.f32 %v495, 0.0
    %v752 = vmax.f32 %v496, 0.0
    %v753 = vmax.f32 %v497, 0.0
    %v754 = vmax.f32 %v498, 0.0
    %v755 = vmax.f32 %v499, 0.0
    %v756 = vmax.f32 %v500, 0.0
    %v757 = vmax.f32 %v501, 0.0
    %v758 = vmax.f32 %v502, 0.0
    %v759 = vmax.f32 %v503, 0.0
    %v760 = vmax.f32 %v504, 0.0
    %v761 = vmax.f32 %v505, 0.0
    %v762 = vmax.f32 %v506, 0.0
    %v763 = vmax.f32 %v507, 0.0
    %v764 = vmax.f32 %v508, 0.0
    %v765 = vmax.f32 %v509, 0.0
    %v766 = vmax.f32 %v510, 0.0
    %v767 = vmax.f32 %v511, 0.0
    %v768 = vmax.f32 %v512, 0.0
    %v769 = vmax.f32 %v513, 0.0
    %v770 = vmax.f32 %v514, 0.0
    %v771 = vmax.f32 %v515, 0.0
    %v772 = vmax.f32 %v516, 0.0
    %v773 = vmax.f32 %v517, 0.0
    %v774 = vmax.f32 %v518, 0.0
    %v775 = vmax.f32 %v519, 0.0
    %v776 = vmax.f32 %v520, 0.0
    %v777 = vmax.f32 %v521, 0.0
    %v778 = vmax.f32 %v522, 0.0
    %v779 = vmax.f32 %v523, 0.0
    %v780 = vmax.f32 %v524, 0.0
    %v781 = vmax.f32 %v525, 0.0
    %v782 = vmax.f32 %v526, 0.0
    %v783 = vmax.f32 %v527, 0.0
    %v784 = vmax.f32 %v528, 0.0
    %v785 = vmax.f32 %v529, 0.0
    %v786 = vmax.f32 %v530, 0.0
    %v787 = vmax.f32 %v531, 0.0
    %v788 = vmax.f32 %v532, 0.0
    %v789 = vmax.f32 %v533, 0.0
    %v790 = vmax.f32 %v534, 0.0
    %v791 = vmin.f32 %v535, 6.0
    %v792 = vmin.f32 %v536, 6.0
    %v793 = vmin.f32 %v537, 6.0
    %v794 = vmin.f32 %v538, 6.0
    %v795 = vmin.f32 %v539, 6.0
    %v796 = vmin.f32 %v540, 6.0
    %v797 = vmin.f32 %v541, 6.0
    %v798 = vmin.f32 %v542, 6.0
    %v799 = vmin.f32 %v543, 6.0
    %v800 = vmin.f32 %v544, 6.0
    %v801 = vmin.f32 %v545, 6.0
    %v802 = vmin.f32 %v546, 6.0
    %v803 = vmin.f32 %v547, 6.0
    %v804 = vmin.f32 %v548, 6.0
    %v805 = vmin.f32 %v549, 6.0
    %v806 = vmin.f32 %v550, 6.0
    %v807 = vmin.f32 %v551, 6.0
    %v808 = vmin.f32 %v552, 6.0
    %v809 = vmin.f32 %v553, 6.0
    %v810 = vmin.f32 %v554, 6.0
    %v811 = vmin.f32 %v555, 6.0
    %v812 = vmin.f32 %v556, 6.0
    %v813 = vmin.f32 %v557, 6.0
    %v814 = vmin.f32 %v558, 6.0
    %v815 = vmin.f32 %v559, 6.0
    %v816 = vmin.f32 %v560, 6.0
    %v817 = vmin.f32 %v561, 6.0
    %v818 = vmin.f32 %v562, 6.0
    %v819 = vmin.f32 %v563, 6.0
    %v820 = vmin.f32 %v564, 6.0
    %v821 = vmin.f32 %v565, 6.0
    %v822 = vmin.f32 %v566, 6.0
    %v823 = vmin.f32 %v567, 6.0
    %v824 = vmin.f32 %v568, 6.0
    %v825 = vmin.f32 %v569, 6.0
    %v826 = vmin.f32 %v570, 6.0
    %v827 = vmin.f32 %v571, 6.0
    %v828 = vmin.f32 %v572, 6.0
    %v829 = vmin.f32 %v573, 6.0
    %v830 = vmin.f32 %v574, 6.0
    %v831 = vmin.f32 %v575, 6.0
    %v832 = vmin.f32 %v576, 6.0
    %v833 = vmin.f32 %v577, 6.0
    %v834 = vmin.f32 %v578, 6.0
    %v835 = vmin.f32 %v579, 6.0
    %v836 = vmin.f32 %v580, 6.0
    %v837 = vmin.f32 %v581, 6.0
    %v838 = vmin.f32 %v582, 6.0
    %v839 = vmin.f32 %v583, 6.0
    %v840 = vmin.f32 %v584, 6.0
    %v841 = vmin.f32 %v585, 6.0
    %v842 = vmin.f32 %v586, 6.0
    %v843 = vmin.f32 %v587, 6.0
    %v844 = vmin.f32 %v588, 6.0
    %v845 = vmin.f32 %v589, 6.0
    %v846 = vmin.f32 %v590, 6.0
    %v847 = vmin.f32 %v591, 6.0
    %v848 = vmin.f32 %v592, 6.0
    %v849 = vmin.f32 %v593, 6.0
    %v850 = vmin.f32 %v594, 6.0
    %v851 = vmin.f32 %v595, 6.0
    %v852 = vmin.f32 %v596, 6.0
    %v853 = vmin.f32 %v597, 6.0
    %v854 = vmin.f32 %v598, 6.0
    %v855 = vmin.f32 %v599, 6.0
    %v856 = vmin.f32 %v600, 6.0
    %v857 = vmin.f32 %v601, 6.0
    %v858 = vmin.f32 %v602, 6.0
    %v859 = vmin.f32 %v603, 6.0
    %v860 = vmin.f32 %v604, 6.0
    %v861 = vmin.f32 %v605, 6.0
    %v862 = vmin.f32 %v606, 6.0
    %v863 = vmin.f32 %v607, 6.0
    %v864 = vmin.f32 %v608, 6.0
    %v865 = vmin.f32 %v609, 6.0
    %v866 = vmin.f32 %v610, 6.0
    %v867 = vmin.f32 %v611, 6.0
    %v868 = vmin.f32 %v612, 6.0
    %v869 = vmin.f32 %v613, 6.0
    %v870 = vmin.f32 %v614, 6.0
    %v871 = vmin.f32 %v615, 6.0
    %v872 = vmin.f32 %v616, 6.0
    %v873 = vmin.f32 %v617, 6.0
    %v874 = vmin.f32 %v618, 6.0
    %v875 = vmin.f32 %v619, 6.0
    %v876 = vmin.f32 %v620, 6.0
    %v877 = vmin.f32 %v621, 6.0
    %v878 = vmin.f32 %v622, 6.0
    %v879 = vmin.f32 %v623, 6.0
    %v880 = vmin.f32 %v624, 6.0
    %v881 = vmin.f32 %v625, 6.0
    %v882 = vmin.f32 %v626, 6.0
    %v883 = vmin.f32 %v627, 6.0
    %v884 = vmin.f32 %v628, 6.0
    %v885 = vmin.f32 %v629, 6.0
    %v886 = vmin.f32 %v630, 6.0
    %v887 = vmin.f32 %v631, 6.0
    %v888 = vmin.f32 %v632, 6.0
    %v889 = vmin.f32 %v633, 6.0
    %v890 = vmin.f32 %v634, 6.0
    %v891 = vmin.f32 %v635, 6.0
    %v892 = vmin.f32 %v636, 6.0
    %v893 = vmin.f32 %v637, 6.0
    %v894 = vmin.f32 %v638, 6.0
    %v895 = vmin.f32 %v639, 6.0
    %v896 = vmin.f32 %v640, 6.0
    %v897 = vmin.f32 %v641, 6.0
    %v898 = vmin.f32 %v642, 6.0
    %v899 = vmin.f32 %v643, 6.0
    %v900 = vmin.f32 %v644, 6.0
    %v901 = vmin.f32 %v645, 6.0
    %v902 = vmin.f32 %v646, 6.0
    %v903 = vmin.f32 %v647, 6.0
    %v904 = vmin.f32 %v648, 6.0
    %v905 = vmin.f32 %v649, 6.0
    %v906 = vmin.f32 %v650, 6.0
    %v907 = vmin.f32 %v651, 6.0
    %v908 = vmin.f32 %v652, 6.0
    %v909 = vmin.f32 %v653, 6.0
    %v910 = vmin.f32 %v654, 6.0
    %v911 = vmin.f32 %v655, 6.0
    %v912 = vmin.f32 %v656, 6.0
    %v913 = vmin.f32 %v657, 6.0
    %v914 = vmin.f32 %v658, 6.0
    %v915 = vmin.f32 %v659, 6.0
    %v916 = vmin.f32 %v660, 6.0
    %v917 = vmin.f32 %v661, 6.0
    %v918 = vmin.f32 %v662, 6.0
    %v919 = vmin.f32 %v663, 6.0
    %v920 = vmin.f32 %v664, 6.0
    %v921 = vmin.f32 %v665, 6.0
    %v922 = vmin.f32 %v666, 6.0
    %v923 = vmin.f32 %v667, 6.0
    %v924 = vmin.f32 %v668, 6.0
    %v925 = vmin.f32 %v669, 6.0
    %v926 = vmin.f32 %v670, 6.0
    %v927 = vmin.f32 %v671, 6.0
    %v928 = vmin.f32 %v672, 6.0
    %v929 = vmin.f32 %v673, 6.0
    %v930 = vmin.f32 %v674, 6.0
    %v931 = vmin.f32 %v675, 6.0
    %v932 = vmin.f32 %v676, 6.0
    %v933 = vmin.f32 %v677, 6.0
    %v934 = vmin.f32 %v678, 6.0
    %v935 = vmin.f32 %v679, 6.0
    %v936 = vmin.f32 %v680, 6.0
    %v937 = vmin.f32 %v681, 6.0
    %v938 = vmin.f32 %v682, 6.0
    %v939 = vmin.f32 %v683, 6.0
    %v940 = vmin.f32 %v684, 6.0
    %v941 = vmin.f32 %v685, 6.0
    %v942 = vmin.f32 %v686, 6.0
    %v943 = vmin.f32 %v687, 6.0
    %v944 = vmin.f32 %v688, 6.0
    %v945 = vmin.f32 %v689, 6.0
    %v946 = vmin.f32 %v690, 6.0
    %v947 = vmin.f32 %v691, 6.0
    %v948 = vmin.f32 %v692, 6.0
    %v949 = vmin.f32 %v693, 6.0
    %v950 = vmin.f32 %v694, 6.0
    %v951 = vmin.f32 %v695, 6.0
    %v952 = vmin.f32 %v696, 6.0
    %v953 = vmin.f32 %v697, 6.0
    %v954 = vmin.f32 %v698, 6.0
    %v955 = vmin.f32 %v699, 6.0
    %v956 = vmin.f32 %v700, 6.0
    %v957 = vmin.f32 %v701, 6.0
    %v958 = vmin.f32 %v702, 6.0
    %v959 = vmin.f32 %v703, 6.0
    %v960 = vmin.f32 %v704, 6.0
    %v961 = vmin.f32 %v705, 6.0
    %v962 = vmin.f32 %v706, 6.0
    %v963 = vmin.f32 %v707, 6.0
    %v964 = vmin.f32 %v708, 6.0
    %v965 = vmin.f32 %v709, 6.0
    %v966 = vmin.f32 %v710, 6.0
    %v967 = vmin.f32 %v711, 6.0
    %v968 = vmin.f32 %v712, 6.0
    %v969 = vmin.f32 %v713, 6.0
    %v970 = vmin.f32 %v714, 6.0
    %v971 = vmin.f32 %v715, 6.0
    %v972 = vmin.f32 %v716, 6.0
    %v973 = vmin.f32 %v717, 6.0
    %v974 = vmin.f32 %v718, 6.0
    %v975 = vmin.f32 %v719, 6.0
    %v976 = vmin.f32 %v720, 6.0
    %v977 = vmin.f32 %v721, 6.0
    %v978 = vmin.f32 %v722, 6.0
    %v979 = vmin.f32 %v723, 6.0
    %v980 = vmin.f32 %v724, 6.0
    %v981 = vmin.f32 %v725, 6.0
    %v982 = vmin.f32 %v726, 6.0
    %v983 = vmin.f32 %v727, 6.0
    %v984 = vmin.f32 %v728, 6.0
    %v985 = vmin.f32 %v729, 6.0
    %v986 = vmin.f32 %v730, 6.0
    %v987 = vmin.f32 %v731, 6.0
    %v988 = vmin.f32 %v732, 6.0
    %v989 = vmin.f32 %v733, 6.0
    %v990 = vmin.f32 %v734, 6.0
    %v991 = vmin.f32 %v735, 6.0
    %v992 = vmin.f32 %v736, 6.0
    %v993 = vmin.f32 %v737, 6.0
    %v994 = vmin.f32 %v738, 6.0
    %v995 = vmin.f32 %v739, 6.0
    %v996 = vmin.f32 %v740, 6.0
    %v997 = vmin.f32 %v741, 6.0
    %v998 = vmin.f32 %v742, 6.0
    %v999 = vmin.f32 %v743, 6.0
    %v1000 = vmin.f32 %v744, 6.0
    %v1001 = vmin.f32 %v745, 6.0
    %v1002 = vmin.f32 %v746, 6.0
    %v1003 = vmin.f32 %v747, 6.0
    %v1004 = vmin.f32 %v748, 6.0
    %v1005 = vmin.f32 %v749, 6.0
    %v1006 = vmin.f32 %v750, 6.0
    %v1007 = vmin.f32 %v751, 6.0
    %v1008 = vmin.f32 %v752, 6.0
    %v1009 = vmin.f32 %v753, 6.0
    %v1010 = vmin.f32 %v754, 6.0
    %v1011 = vmin.f32 %v755, 6.0
    %v1012 = vmin.f32 %v756, 6.0
    %v1013 = vmin.f32 %v757, 6.0
    %v1014 = vmin.f32 %v758, 6.0
    %v1015 = vmin.f32 %v759, 6.0
    %v1016 = vmin.f32 %v760, 6.0
    %v1017 = vmin.f32 %v761, 6.0
    %v1018 = vmin.f32 %v762, 6.0
    %v1019 = vmin.f32 %v763, 6.0
    %v1020 = vmin.f32 %v764, 6.0
    %v1021 = vmin.f32 %v765, 6.0
    %v1022 = vmin.f32 %v766, 6.0
    %v1023 = vmin.f32 %v767, 6.0
    %v1024 = vmin.f32 %v768, 6.0
    %v1025 = vmin.f32 %v769, 6.0
    %v1026 = vmin.f32 %v770, 6.0
    %v1027 = vmin.f32 %v771, 6.0
    %v1028 = vmin.f32 %v772, 6.0
    %v1029 = vmin.f32 %v773, 6.0
    %v1030 = vmin.f32 %v774, 6.0
    %v1031 = vmin.f32 %v775, 6.0
    %v1032 = vmin.f32 %v776, 6.0
    %v1033 = vmin.f32 %v777, 6.0
    %v1034 = vmin.f32 %v778, 6.0
    %v1035 = vmin.f32 %v779, 6.0
    %v1036 = vmin.f32 %v780, 6.0
    %v1037 = vmin.f32 %v781, 6.0
    %v1038 = vmin.f32 %v782, 6.0
    %v1039 = vmin.f32 %v783, 6.0
    %v1040 = vmin.f32 %v784, 6.0
    %v1041 = vmin.f32 %v785, 6.0
    %v1042 = vmin.f32 %v786, 6.0
    %v1043 = vmin.f32 %v787, 6.0
    %v1044 = vmin.f32 %v788, 6.0
    %v1045 = vmin.f32 %v789, 6.0
    %v1046 = vmin.f32 %v790, 6.0
    %v1047 = vmul.f32 %v791, 0.16666667
    %v1048 = vmul.f32 %v792, 0.16666667
    %v1049 = vmul.f32 %v793, 0.16666667
    %v1050 = vmul.f32 %v794, 0.16666667
    %v1051 = vmul.f32 %v795, 0.16666667
    %v1052 = vmul.f32 %v796, 0.16666667
    %v1053 = vmul.f32 %v797, 0.16666667
    %v1054 = vmul.f32 %v798, 0.16666667
    %v1055 = vmul.f32 %v799, 0.16666667
    %v1056 = vmul.f32 %v800, 0.16666667
    %v1057 = vmul.f32 %v801, 0.16666667
    %v1058 = vmul.f32 %v802, 0.16666667
    %v1059 = vmul.f32 %v803, 0.16666667
    %v1060 = vmul.f32 %v804, 0.16666667
    %v1061 = vmul.f32 %v805, 0.16666667
    %v1062 = vmul.f32 %v806, 0.16666667
    %v1063 = vmul.f32 %v807, 0.16666667
    %v1064 = vmul.f32 %v808, 0.16666667
    %v1065 = vmul.f32 %v809, 0.16666667
    %v1066 = vmul.f32 %v810, 0.16666667
    %v1067 = vmul.f32 %v811, 0.16666667
    %v1068 = vmul.f32 %v812, 0.16666667
    %v1069 = vmul.f32 %v813, 0.16666667
    %v1070 = vmul.f32 %v814, 0.16666667
    %v1071 = vmul.f32 %v815, 0.16666667
    %v1072 = vmul.f32 %v816, 0.16666667
    %v1073 = vmul.f32 %v817, 0.16666667
    %v1074 = vmul.f32 %v818, 0.16666667
    %v1075 = vmul.f32 %v819, 0.16666667
    %v1076 = vmul.f32 %v820, 0.16666667
    %v1077 = vmul.f32 %v821, 0.16666667
    %v1078 = vmul.f32 %v822, 0.16666667
    %v1079 = vmul.f32 %v823, 0.16666667
    %v1080 = vmul.f32 %v824, 0.16666667
    %v1081 = vmul.f32 %v825, 0.16666667
    %v1082 = vmul.f32 %v826, 0.16666667
    %v1083 = vmul.f32 %v827, 0.16666667
    %v1084 = vmul.f32 %v828, 0.16666667
    %v1085 = vmul.f32 %v829, 0.16666667
    %v1086 = vmul.f32 %v830, 0.16666667
    %v1087 = vmul.f32 %v831, 0.16666667
    %v1088 = vmul.f32 %v832, 0.16666667
    %v1089 = vmul.f32 %v833, 0.16666667
    %v1090 = vmul.f32 %v834, 0.16666667
    %v1091 = vmul.f32 %v835, 0.16666667
    %v1092 = vmul.f32 %v836, 0.16666667
    %v1093 = vmul.f32 %v837, 0.16666667
    %v1094 = vmul.f32 %v838, 0.16666667
    %v1095 = vmul.f32 %v839, 0.16666667
    %v1096 = vmul.f32 %v840, 0.16666667
    %v1097 = vmul.f32 %v841, 0.16666667
    %v1098 = vmul.f32 %v842, 0.16666667
    %v1099 = vmul.f32 %v843, 0.16666667
    %v1100 = vmul.f32 %v844, 0.16666667
    %v1101 = vmul.f32 %v845, 0.16666667
    %v1102 = vmul.f32 %v846, 0.16666667
    %v1103 = vmul.f32 %v847, 0.16666667
    %v1104 = vmul.f32 %v848, 0.16666667
    %v1105 = vmul.f32 %v849, 0.16666667
    %v1106 = vmul.f32 %v850, 0.16666667
    %v1107 = vmul.f32 %v851, 0.16666667
    %v1108 = vmul.f32 %v852, 0.16666667
    %v1109 = vmul.f32 %v853, 0.16666667
    %v1110 = vmul.f32 %v854, 0.16666667
    %v1111 = vmul.f32 %v855, 0.16666667
    %v1112 = vmul.f32 %v856, 0.16666667
    %v1113 = vmul.f32 %v857, 0.16666667
    %v1114 = vmul.f32 %v858, 0.16666667
    %v1115 = vmul.f32 %v859, 0.16666667
    %v1116 = vmul.f32 %v860, 0.16666667
    %v1117 = vmul.f32 %v861, 0.16666667
    %v1118 = vmul.f32 %v862, 0.16666667
    %v1119 = vmul.f32 %v863, 0.16666667
    %v1120 = vmul.f32 %v864, 0.16666667
    %v1121 = vmul.f32 %v865, 0.16666667
    %v1122 = vmul.f32 %v866, 0.16666667
    %v1123 = vmul.f32 %v867, 0.16666667
    %v1124 = vmul.f32 %v868, 0.16666667
    %v1125 = vmul.f32 %v869, 0.16666667
    %v1126 = vmul.f32 %v870, 0.16666667
    %v1127 = vmul.f32 %v871, 0.16666667
    %v1128 = vmul.f32 %v872, 0.16666667
    %v1129 = vmul.f32 %v873, 0.16666667
    %v1130 = vmul.f32 %v874, 0.16666667
    %v1131 = vmul.f32 %v875, 0.16666667
    %v1132 = vmul.f32 %v876, 0.16666667
    %v1133 = vmul.f32 %v877, 0.16666667
    %v1134 = vmul.f32 %v878, 0.16666667
    %v1135 = vmul.f32 %v879, 0.16666667
    %v1136 = vmul.f32 %v880, 0.16666667
    %v1137 = vmul.f32 %v881, 0.16666667
    %v1138 = vmul.f32 %v882, 0.16666667
    %v1139 = vmul.f32 %v883, 0.16666667
    %v1140 = vmul.f32 %v884, 0.16666667
    %v1141 = vmul.f32 %v885, 0.16666667
    %v1142 = vmul.f32 %v886, 0.16666667
    %v1143 = vmul.f32 %v887, 0.16666667
    %v1144 = vmul.f32 %v888, 0.16666667
    %v1145 = vmul.f32 %v889, 0.16666667
    %v1146 = vmul.f32 %v890, 0.16666667
    %v1147 = vmul.f32 %v891, 0.16666667
    %v1148 = vmul.f32 %v892, 0.16666667
    %v1149 = vmul.f32 %v893, 0.16666667
    %v1150 = vmul.f32 %v894, 0.16666667
    %v1151 = vmul.f32 %v895, 0.16666667
    %v1152 = vmul.f32 %v896, 0.16666667
    %v1153 = vmul.f32 %v897, 0.16666667
    %v1154 = vmul.f32 %v898, 0.16666667
    %v1155 = vmul.f32 %v899, 0.16666667
    %v1156 = vmul.f32 %v900, 0.16666667
    %v1157 = vmul.f32 %v901, 0.16666667
    %v1158 = vmul.f32 %v902, 0.16666667
    %v1159 = vmul.f32 %v903, 0.16666667
    %v1160 = vmul.f32 %v904, 0.16666667
    %v1161 = vmul.f32 %v905, 0.16666667
    %v1162 = vmul.f32 %v906, 0.16666667
    %v1163 = vmul.f32 %v907, 0.16666667
    %v1164 = vmul.f32 %v908, 0.16666667
    %v1165 = vmul.f32 %v909, 0.16666667
    %v1166 = vmul.f32 %v910, 0.16666667
    %v1167 = vmul.f32 %v911, 0.16666667
    %v1168 = vmul.f32 %v912, 0.16666667
    %v1169 = vmul.f32 %v913, 0.16666667
    %v1170 = vmul.f32 %v914, 0.16666667
    %v1171 = vmul.f32 %v915, 0.16666667
    %v1172 = vmul.f32 %v916, 0.16666667
    %v1173 = vmul.f32 %v917, 0.16666667
    %v1174 = vmul.f32 %v918, 0.16666667
    %v1175 = vmul.f32 %v919, 0.16666667
    %v1176 = vmul.f32 %v920, 0.16666667
    %v1177 = vmul.f32 %v921, 0.16666667
    %v1178 = vmul.f32 %v922, 0.16666667
    %v1179 = vmul.f32 %v923, 0.16666667
    %v1180 = vmul.f32 %v924, 0.16666667
    %v1181 = vmul.f32 %v925, 0.16666667
    %v1182 = vmul.f32 %v926, 0.16666667
    %v1183 = vmul.f32 %v927, 0.16666667
    %v1184 = vmul.f32 %v928, 0.16666667
    %v1185 = vmul.f32 %v929, 0.16666667
    %v1186 = vmul.f32 %v930, 0.16666667
    %v1187 = vmul.f32 %v931, 0.16666667
    %v1188 = vmul.f32 %v932, 0.16666667
    %v1189 = vmul.f32 %v933, 0.16666667
    %v1190 = vmul.f32 %v934, 0.16666667
    %v1191 = vmul.f32 %v935, 0.16666667
    %v1192 = vmul.f32 %v936, 0.16666667
    %v1193 = vmul.f32 %v937, 0.16666667
    %v1194 = vmul.f32 %v938, 0.16666667
    %v1195 = vmul.f32 %v939, 0.16666667
    %v1196 = vmul.f32 %v940, 0.16666667
    %v1197 = vmul.f32 %v941, 0.16666667
    %v1198 = vmul.f32 %v942, 0.16666667
    %v1199 = vmul.f32 %v943, 0.16666667
    %v1200 = vmul.f32 %v944, 0.16666667
    %v1201 = vmul.f32 %v945, 0.16666667
    %v1202 = vmul.f32 %v946, 0.16666667
    %v1203 = vmul.f32 %v947, 0.16666667
    %v1204 = vmul.f32 %v948, 0.16666667
    %v1205 = vmul.f32 %v949, 0.16666667
    %v1206 = vmul.f32 %v950, 0.16666667
    %v1207 = vmul.f32 %v951, 0.16666667
    %v1208 = vmul.f32 %v952, 0.16666667
    %v1209 = vmul.f32 %v953, 0.16666667
    %v1210 = vmul.f32 %v954, 0.16666667
    %v1211 = vmul.f32 %v955, 0.16666667
    %v1212 = vmul.f32 %v956, 0.16666667
    %v1213 = vmul.f32 %v957, 0.16666667
    %v1214 = vmul.f32 %v958, 0.16666667
    %v1215 = vmul.f32 %v959, 0.16666667
    %v1216 = vmul.f32 %v960, 0.16666667
    %v1217 = vmul.f32 %v961, 0.16666667
    %v1218 = vmul.f32 %v962, 0.16666667
    %v1219 = vmul.f32 %v963, 0.16666667
    %v1220 = vmul.f32 %v964, 0.16666667
    %v1221 = vmul.f32 %v965, 0.16666667
    %v1222 = vmul.f32 %v966, 0.16666667
    %v1223 = vmul.f32 %v967, 0.16666667
    %v1224 = vmul.f32 %v968, 0.16666667
    %v1225 = vmul.f32 %v969, 0.16666667
    %v1226 = vmul.f32 %v970, 0.16666667
    %v1227 = vmul.f32 %v971, 0.16666667
    %v1228 = vmul.f32 %v972, 0.16666667
    %v1229 = vmul.f32 %v973, 0.16666667
    %v1230 = vmul.f32 %v974, 0.16666667
    %v1231 = vmul.f32 %v975, 0.16666667
    %v1232 = vmul.f32 %v976, 0.16666667
    %v1233 = vmul.f32 %v977, 0.16666667
    %v1234 = vmul.f32 %v978, 0.16666667
    %v1235 = vmul.f32 %v979, 0.16666667
    %v1236 = vmul.f32 %v980, 0.16666667
    %v1237 = vmul.f32 %v981, 0.16666667
    %v1238 = vmul.f32 %v982, 0.16666667
    %v1239 = vmul.f32 %v983, 0.16666667
    %v1240 = vmul.f32 %v984, 0.16666667
    %v1241 = vmul.f32 %v985, 0.16666667
    %v1242 = vmul.f32 %v986, 0.16666667
    %v1243 = vmul.f32 %v987, 0.16666667
    %v1244 = vmul.f32 %v988, 0.16666667
    %v1245 = vmul.f32 %v989, 0.16666667
    %v1246 = vmul.f32 %v990, 0.16666667
    %v1247 = vmul.f32 %v991, 0.16666667
    %v1248 = vmul.f32 %v992, 0.16666667
    %v1249 = vmul.f32 %v993, 0.16666667
    %v1250 = vmul.f32 %v994, 0.16666667
    %v1251 = vmul.f32 %v995, 0.16666667
    %v1252 = vmul.f32 %v996, 0.16666667
    %v1253 = vmul.f32 %v997, 0.16666667
    %v1254 = vmul.f32 %v998, 0.16666667
    %v1255 = vmul.f32 %v999, 0.16666667
    %v1256 = vmul.f32 %v1000, 0.16666667
    %v1257 = vmul.f32 %v1001, 0.16666667
    %v1258 = vmul.f32 %v1002, 0.16666667
    %v1259 = vmul.f32 %v1003, 0.16666667
    %v1260 = vmul.f32 %v1004, 0.16666667
    %v1261 = vmul.f32 %v1005, 0.16666667
    %v1262 = vmul.f32 %v1006, 0.16666667
    %v1263 = vmul.f32 %v1007, 0.16666667
    %v1264 = vmul.f32 %v1008, 0.16666667
    %v1265 = vmul.f32 %v1009, 0.16666667
    %v1266 = vmul.f32 %v1010, 0.16666667
    %v1267 = vmul.f32 %v1011, 0.16666667
    %v1268 = vmul.f32 %v1012, 0.16666667
    %v1269 = vmul.f32 %v1013, 0.16666667
    %v1270 = vmul.f32 %v1014, 0.16666667
    %v1271 = vmul.f32 %v1015, 0.16666667
    %v1272 = vmul.f32 %v1016, 0.16666667
    %v1273 = vmul.f32 %v1017, 0.16666667
    %v1274 = vmul.f32 %v1018, 0.16666667
    %v1275 = vmul.f32 %v1019, 0.16666667
    %v1276 = vmul.f32 %v1020, 0.16666667
    %v1277 = vmul.f32 %v1021, 0.16666667
    %v1278 = vmul.f32 %v1022, 0.16666667
    %v1279 = vmul.f32 %v1023, 0.16666667
    %v1280 = vmul.f32 %v1024, 0.16666667
    %v1281 = vmul.f32 %v1025, 0.16666667
    %v1282 = vmul.f32 %v1026, 0.16666667
    %v1283 = vmul.f32 %v1027, 0.16666667
    %v1284 = vmul.f32 %v1028, 0.16666667
    %v1285 = vmul.f32 %v1029, 0.16666667
    %v1286 = vmul.f32 %v1030, 0.16666667
    %v1287 = vmul.f32 %v1031, 0.16666667
    %v1288 = vmul.f32 %v1032, 0.16666667
    %v1289 = vmul.f32 %v1033, 0.16666667
    %v1290 = vmul.f32 %v1034, 0.16666667
    %v1291 = vmul.f32 %v1035, 0.16666667
    %v1292 = vmul.f32 %v1036, 0.16666667
    %v1293 = vmul.f32 %v1037, 0.16666667
    %v1294 = vmul.f32 %v1038, 0.16666667
    %v1295 = vmul.f32 %v1039, 0.16666667
    %v1296 = vmul.f32 %v1040, 0.16666667
    %v1297 = vmul.f32 %v1041, 0.16666667
    %v1298 = vmul.f32 %v1042, 0.16666667
    %v1299 = vmul.f32 %v1043, 0.16666667
    %v1300 = vmul.f32 %v1044, 0.16666667
    %v1301 = vmul.f32 %v1045, 0.16666667
    %v1302 = vmul.f32 %v1046, 0.16666667
    %v1303 = vmul.f32 %v23, %v1047
    %v1304 = vmul.f32 %v24, %v1048
    %v1305 = vmul.f32 %v25, %v1049
    %v1306 = vmul.f32 %v26, %v1050
    %v1307 = vmul.f32 %v27, %v1051
    %v1308 = vmul.f32 %v28, %v1052
    %v1309 = vmul.f32 %v29, %v1053
    %v1310 = vmul.f32 %v30, %v1054
    %v1311 = vmul.f32 %v31, %v1055
    %v1312 = vmul.f32 %v32, %v1056
    %v1313 = vmul.f32 %v33, %v1057
    %v1314 = vmul.f32 %v34, %v1058
    %v1315 = vmul.f32 %v35, %v1059
    %v1316 = vmul.f32 %v36, %v1060
    %v1317 = vmul.f32 %v37, %v1061
    %v1318 = vmul.f32 %v38, %v1062
    %v1319 = vmul.f32 %v39, %v1063
    %v1320 = vmul.f32 %v40, %v1064
    %v1321 = vmul.f32 %v41, %v1065
    %v1322 = vmul.f32 %v42, %v1066
    %v1323 = vmul.f32 %v43, %v1067
    %v1324 = vmul.f32 %v44, %v1068
    %v1325 = vmul.f32 %v45, %v1069
    %v1326 = vmul.f32 %v46, %v1070
    %v1327 = vmul.f32 %v47, %v1071
    %v1328 = vmul.f32 %v48, %v1072
    %v1329 = vmul.f32 %v49, %v1073
    %v1330 = vmul.f32 %v50, %v1074
    %v1331 = vmul.f32 %v51, %v1075
    %v1332 = vmul.f32 %v52, %v1076
    %v1333 = vmul.f32 %v53, %v1077
    %v1334 = vmul.f32 %v54, %v1078
    %v1335 = vmul.f32 %v55, %v1079
    %v1336 = vmul.f32 %v56, %v1080
    %v1337 = vmul.f32 %v57, %v1081
    %v1338 = vmul.f32 %v58, %v1082
    %v1339 = vmul.f32 %v59, %v1083
    %v1340 = vmul.f32 %v60, %v1084
    %v1341 = vmul.f32 %v61, %v1085
    %v1342 = vmul.f32 %v62, %v1086
    %v1343 = vmul.f32 %v63, %v1087
    %v1344 = vmul.f32 %v64, %v1088
    %v1345 = vmul.f32 %v65, %v1089
    %v1346 = vmul.f32 %v66, %v1090
    %v1347 = vmul.f32 %v67, %v1091
    %v1348 = vmul.f32 %v68, %v1092
    %v1349 = vmul.f32 %v69, %v1093
    %v1350 = vmul.f32 %v70, %v1094
    %v1351 = vmul.f32 %v71, %v1095
    %v1352 = vmul.f32 %v72, %v1096
    %v1353 = vmul.f32 %v73, %v1097
    %v1354 = vmul.f32 %v74, %v1098
    %v1355 = vmul.f32 %v75, %v1099
    %v1356 = vmul.f32 %v76, %v1100
    %v1357 = vmul.f32 %v77, %v1101
    %v1358 = vmul.f32 %v78, %v1102
    %v1359 = vmul.f32 %v79, %v1103
    %v1360 = vmul.f32 %v80, %v1104
    %v1361 = vmul.f32 %v81, %v1105
    %v1362 = vmul.f32 %v82, %v1106
    %v1363 = vmul.f32 %v83, %v1107
    %v1364 = vmul.f32 %v84, %v1108
    %v1365 = vmul.f32 %v85, %v1109
    %v1366 = vmul.f32 %v86, %v1110
    %v1367 = vmul.f32 %v87, %v1111
    %v1368 = vmul.f32 %v88, %v1112
    %v1369 = vmul.f32 %v89, %v1113
    %v1370 = vmul.f32 %v90, %v1114
    %v1371 = vmul.f32 %v91, %v1115
    %v1372 = vmul.f32 %v92, %v1116
    %v1373 = vmul.f32 %v93, %v1117
    %v1374 = vmul.f32 %v94, %v1118
    %v1375 = vmul.f32 %v95, %v1119
    %v1376 = vmul.f32 %v96, %v1120
    %v1377 = vmul.f32 %v97, %v1121
    %v1378 = vmul.f32 %v98, %v1122
    %v1379 = vmul.f32 %v99, %v1123
    %v1380 = vmul.f32 %v100, %v1124
    %v1381 = vmul.f32 %v101, %v1125
    %v1382 = vmul.f32 %v102, %v1126
    %v1383 = vmul.f32 %v103, %v1127
    %v1384 = vmul.f32 %v104, %v1128
    %v1385 = vmul.f32 %v105, %v1129
    %v1386 = vmul.f32 %v106, %v1130
    %v1387 = vmul.f32 %v107, %v1131
    %v1388 = vmul.f32 %v108, %v1132
    %v1389 = vmul.f32 %v109, %v1133
    %v1390 = vmul.f32 %v110, %v1134
    %v1391 = vmul.f32 %v111, %v1135
    %v1392 = vmul.f32 %v112, %v1136
    %v1393 = vmul.f32 %v113, %v1137
    %v1394 = vmul.f32 %v114, %v1138
    %v1395 = vmul.f32 %v115, %v1139
    %v1396 = vmul.f32 %v116, %v1140
    %v1397 = vmul.f32 %v117, %v1141
    %v1398 = vmul.f32 %v118, %v1142
    %v1399 = vmul.f32 %v119, %v1143
    %v1400 = vmul.f32 %v120, %v1144
    %v1401 = vmul.f32 %v121, %v1145
    %v1402 = vmul.f32 %v122, %v1146
    %v1403 = vmul.f32 %v123, %v1147
    %v1404 = vmul.f32 %v124, %v1148
    %v1405 = vmul.f32 %v125, %v1149
    %v1406 = vmul.f32 %v126, %v1150
    %v1407 = vmul.f32 %v127, %v1151
    %v1408 = vmul.f32 %v128, %v1152
    %v1409 = vmul.f32 %v129, %v1153
    %v1410 = vmul.f32 %v130, %v1154
    %v1411 = vmul.f32 %v131, %v1155
    %v1412 = vmul.f32 %v132, %v1156
    %v1413 = vmul.f32 %v133, %v1157
    %v1414 = vmul.f32 %v134, %v1158
    %v1415 = vmul.f32 %v135, %v1159
    %v1416 = vmul.f32 %v136, %v1160
    %v1417 = vmul.f32 %v137, %v1161
    %v1418 = vmul.f32 %v138, %v1162
    %v1419 = vmul.f32 %v139, %v1163
    %v1420 = vmul.f32 %v140, %v1164
    %v1421 = vmul.f32 %v141, %v1165
    %v1422 = vmul.f32 %v142, %v1166
    %v1423 = vmul.f32 %v143, %v1167
    %v1424 = vmul.f32 %v144, %v1168
    %v1425 = vmul.f32 %v145, %v1169
    %v1426 = vmul.f32 %v146, %v1170
    %v1427 = vmul.f32 %v147, %v1171
    %v1428 = vmul.f32 %v148, %v1172
    %v1429 = vmul.f32 %v149, %v1173
    %v1430 = vmul.f32 %v150, %v1174
    %v1431 = vmul.f32 %v151, %v1175
    %v1432 = vmul.f32 %v152, %v1176
    %v1433 = vmul.f32 %v153, %v1177
    %v1434 = vmul.f32 %v154, %v1178
    %v1435 = vmul.f32 %v155, %v1179
    %v1436 = vmul.f32 %v156, %v1180
    %v1437 = vmul.f32 %v157, %v1181
    %v1438 = vmul.f32 %v158, %v1182
    %v1439 = vmul.f32 %v159, %v1183
    %v1440 = vmul.f32 %v160, %v1184
    %v1441 = vmul.f32 %v161, %v1185
    %v1442 = vmul.f32 %v162, %v1186
    %v1443 = vmul.f32 %v163, %v1187
    %v1444 = vmul.f32 %v164, %v1188
    %v1445 = vmul.f32 %v165, %v1189
    %v1446 = vmul.f32 %v166, %v1190
    %v1447 = vmul.f32 %v167, %v1191
    %v1448 = vmul.f32 %v168, %v1192
    %v1449 = vmul.f32 %v169, %v1193
    %v1450 = vmul.f32 %v170, %v1194
    %v1451 = vmul.f32 %v171, %v1195
    %v1452 = vmul.f32 %v172, %v1196
    %v1453 = vmul.f32 %v173, %v1197
    %v1454 = vmul.f32 %v174, %v1198
    %v1455 = vmul.f32 %v175, %v1199
    %v1456 = vmul.f32 %v176, %v1200
    %v1457 = vmul.f32 %v177, %v1201
    %v1458 = vmul.f32 %v178, %v1202
    %v1459 = vmul.f32 %v179, %v1203
    %v1460 = vmul.f32 %v180, %v1204
    %v1461 = vmul.f32 %v181, %v1205
    %v1462 = vmul.f32 %v182, %v1206
    %v1463 = vmul.f32 %v183, %v1207
    %v1464 = vmul.f32 %v184, %v1208
    %v1465 = vmul.f32 %v185, %v1209
    %v1466 = vmul.f32 %v186, %v1210
    %v1467 = vmul.f32 %v187, %v1211
    %v1468 = vmul.f32 %v188, %v1212
    %v1469 = vmul.f32 %v189, %v1213
    %v1470 = vmul.f32 %v190, %v1214
    %v1471 = vmul.f32 %v191, %v1215
    %v1472 = vmul.f32 %v192, %v1216
    %v1473 = vmul.f32 %v193, %v1217
    %v1474 = vmul.f32 %v194, %v1218
    %v1475 = vmul.f32 %v195, %v1219
    %v1476 = vmul.f32 %v196, %v1220
    %v1477 = vmul.f32 %v197, %v1221
    %v1478 = vmul.f32 %v198, %v1222
    %v1479 = vmul.f32 %v199, %v1223
    %v1480 = vmul.f32 %v200, %v1224
    %v1481 = vmul.f32 %v201, %v1225
    %v1482 = vmul.f32 %v202, %v1226
    %v1483 = vmul.f32 %v203, %v1227
    %v1484 = vmul.f32 %v204, %v1228
    %v1485 = vmul.f32 %v205, %v1229
    %v1486 = vmul.f32 %v206, %v1230
    %v1487 = vmul.f32 %v207, %v1231
    %v1488 = vmul.f32 %v208, %v1232
    %v1489 = vmul.f32 %v209, %v1233
    %v1490 = vmul.f32 %v210, %v1234
    %v1491 = vmul.f32 %v211, %v1235
    %v1492 = vmul.f32 %v212, %v1236
    %v1493 = vmul.f32 %v213, %v1237
    %v1494 = vmul.f32 %v214, %v1238
    %v1495 = vmul.f32 %v215, %v1239
    %v1496 = vmul.f32 %v216, %v1240
    %v1497 = vmul.f32 %v217, %v1241
    %v1498 = vmul.f32 %v218, %v1242
    %v1499 = vmul.f32 %v219, %v1243
    %v1500 = vmul.f32 %v220, %v1244
    %v1501 = vmul.f32 %v221, %v1245
    %v1502 = vmul.f32 %v222, %v1246
    %v1503 = vmul.f32 %v223, %v1247
    %v1504 = vmul.f32 %v224, %v1248
    %v1505 = vmul.f32 %v225, %v1249
    %v1506 = vmul.f32 %v226, %v1250
    %v1507 = vmul.f32 %v227, %v1251
    %v1508 = vmul.f32 %v228, %v1252
    %v1509 = vmul.f32 %v229, %v1253
    %v1510 = vmul.f32 %v230, %v1254
    %v1511 = vmul.f32 %v231, %v1255
    %v1512 = vmul.f32 %v232, %v1256
    %v1513 = vmul.f32 %v233, %v1257
    %v1514 = vmul.f32 %v234, %v1258
    %v1515 = vmul.f32 %v235, %v1259
    %v1516 = vmul.f32 %v236, %v1260
    %v1517 = vmul.f32 %v237, %v1261
    %v1518 = vmul.f32 %v238, %v1262
    %v1519 = vmul.f32 %v239, %v1263
    %v1520 = vmul.f32 %v240, %v1264
    %v1521 = vmul.f32 %v241, %v1265
    %v1522 = vmul.f32 %v242, %v1266
    %v1523 = vmul.f32 %v243, %v1267
    %v1524 = vmul.f32 %v244, %v1268
    %v1525 = vmul.f32 %v245, %v1269
    %v1526 = vmul.f32 %v246, %v1270
    %v1527 = vmul.f32 %v247, %v1271
    %v1528 = vmul.f32 %v248, %v1272
    %v1529 = vmul.f32 %v249, %v1273
    %v1530 = vmul.f32 %v250, %v1274
    %v1531 = vmul.f32 %v251, %v1275
    %v1532 = vmul.f32 %v252, %v1276
    %v1533 = vmul.f32 %v253, %v1277
    %v1534 = vmul.f32 %v254, %v1278
    %v1535 = vmul.f32 %v255, %v1279
    %v1536 = vmul.f32 %v256, %v1280
    %v1537 = vmul.f32 %v257, %v1281
    %v1538 = vmul.f32 %v258, %v1282
    %v1539 = vmul.f32 %v259, %v1283
    %v1540 = vmul.f32 %v260, %v1284
    %v1541 = vmul.f32 %v261, %v1285
    %v1542 = vmul.f32 %v262, %v1286
    %v1543 = vmul.f32 %v263, %v1287
    %v1544 = vmul.f32 %v264, %v1288
    %v1545 = vmul.f32 %v265, %v1289
    %v1546 = vmul.f32 %v266, %v1290
    %v1547 = vmul.f32 %v267, %v1291
    %v1548 = vmul.f32 %v268, %v1292
    %v1549 = vmul.f32 %v269, %v1293
    %v1550 = vmul.f32 %v270, %v1294
    %v1551 = vmul.f32 %v271, %v1295
    %v1552 = vmul.f32 %v272, %v1296
    %v1553 = vmul.f32 %v273, %v1297
    %v1554 = vmul.f32 %v274, %v1298
    %v1555 = vmul.f32 %v275, %v1299
    %v1556 = vmul.f32 %v276, %v1300
    %v1557 = vmul.f32 %v277, %v1301
    %v1558 = vmul.f32 %v278, %v1302
    %1559 = vst [vmem:[#allocation5] sm:$0xff] %v1303
    %1560 = vst [vmem:[#allocation5 + $0x8] sm:$0xff] %v1304
    %1561 = vst [vmem:[#allocation5 + $0x10] sm:$0xff] %v1305
    %1562 = vst [vmem:[#allocation5 + $0x18] sm:$0xff] %v1306
    %1563 = vst [vmem:[#allocation5 + $0x20] sm:$0xff] %v1307
    %1564 = vst [vmem:[#allocation5 + $0x28] sm:$0xff] %v1308
    %1565 = vst [vmem:[#allocation5 + $0x30] sm:$0xff] %v1309
    %1566 = vst [vmem:[#allocation5 + $0x38] sm:$0xff] %v1310
    %1567 = vst [vmem:[#allocation5 + $0x40] sm:$0xff] %v1311
    %1568 = vst [vmem:[#allocation5 + $0x48] sm:$0xff] %v1312
    %1569 = vst [vmem:[#allocation5 + $0x50] sm:$0xff] %v1313
    %1570 = vst [vmem:[#allocation5 + $0x58] sm:$0xff] %v1314
    %1571 = vst [vmem:[#allocation5 + $0x60] sm:$0xff] %v1315
    %1572 = vst [vmem:[#allocation5 + $0x68] sm:$0xff] %v1316
    %1573 = vst [vmem:[#allocation5 + $0x70] sm:$0xff] %v1317
    %1574 = vst [vmem:[#allocation5 + $0x78] sm:$0xff] %v1318
    %1575 = vst [vmem:[#allocation5 + $0x80] sm:$0xff] %v1319
    %1576 = vst [vmem:[#allocation5 + $0x88] sm:$0xff] %v1320
    %1577 = vst [vmem:[#allocation5 + $0x90] sm:$0xff] %v1321
    %1578 = vst [vmem:[#allocation5 + $0x98] sm:$0xff] %v1322
    %1579 = vst [vmem:[#allocation5 + $0xa0] sm:$0xff] %v1323
    %1580 = vst [vmem:[#allocation5 + $0xa8] sm:$0xff] %v1324
    %1581 = vst [vmem:[#allocation5 + $0xb0] sm:$0xff] %v1325
    %1582 = vst [vmem:[#allocation5 + $0xb8] sm:$0xff] %v1326
    %1583 = vst [vmem:[#allocation5 + $0xc0] sm:$0xff] %v1327
    %1584 = vst [vmem:[#allocation5 + $0xc8] sm:$0xff] %v1328
    %1585 = vst [vmem:[#allocation5 + $0xd0] sm:$0xff] %v1329
    %1586 = vst [vmem:[#allocation5 + $0xd8] sm:$0xff] %v1330
    %1587 = vst [vmem:[#allocation5 + $0xe0] sm:$0xff] %v1331
    %1588 = vst [vmem:[#allocation5 + $0xe8] sm:$0xff] %v1332
    %1589 = vst [vmem:[#allocation5 + $0xf0] sm:$0xff] %v1333
    %1590 = vst [vmem:[#allocation5 + $0xf8] sm:$0xff] %v1334
    %1591 = vst [vmem:[#allocation5 + $0x100] sm:$0xff] %v1335
    %1592 = vst [vmem:[#allocation5 + $0x108] sm:$0xff] %v1336
    %1593 = vst [vmem:[#allocation5 + $0x110] sm:$0xff] %v1337
    %1594 = vst [vmem:[#allocation5 + $0x118] sm:$0xff] %v1338
    %1595 = vst [vmem:[#allocation5 + $0x120] sm:$0xff] %v1339
    %1596 = vst [vmem:[#allocation5 + $0x128] sm:$0xff] %v1340
    %1597 = vst [vmem:[#allocation5 + $0x130] sm:$0xff] %v1341
    %1598 = vst [vmem:[#allocation5 + $0x138] sm:$0xff] %v1342
    %1599 = vst [vmem:[#allocation5 + $0x140] sm:$0xff] %v1343
    %1600 = vst [vmem:[#allocation5 + $0x148] sm:$0xff] %v1344
    %1601 = vst [vmem:[#allocation5 + $0x150] sm:$0xff] %v1345
    %1602 = vst [vmem:[#allocation5 + $0x158] sm:$0xff] %v1346
    %1603 = vst [vmem:[#allocation5 + $0x160] sm:$0xff] %v1347
    %1604 = vst [vmem:[#allocation5 + $0x168] sm:$0xff] %v1348
    %1605 = vst [vmem:[#allocation5 + $0x170] sm:$0xff] %v1349
    %1606 = vst [vmem:[#allocation5 + $0x178] sm:$0xff] %v1350
    %1607 = vst [vmem:[#allocation5 + $0x180] sm:$0xff] %v1351
    %1608 = vst [vmem:[#allocation5 + $0x188] sm:$0xff] %v1352
    %1609 = vst [vmem:[#allocation5 + $0x190] sm:$0xff] %v1353
    %1610 = vst [vmem:[#allocation5 + $0x198] sm:$0xff] %v1354
    %1611 = vst [vmem:[#allocation5 + $0x1a0] sm:$0xff] %v1355
    %1612 = vst [vmem:[#allocation5 + $0x1a8] sm:$0xff] %v1356
    %1613 = vst [vmem:[#allocation5 + $0x1b0] sm:$0xff] %v1357
    %1614 = vst [vmem:[#allocation5 + $0x1b8] sm:$0xff] %v1358
    %1615 = vst [vmem:[#allocation5 + $0x1c0] sm:$0xff] %v1359
    %1616 = vst [vmem:[#allocation5 + $0x1c8] sm:$0xff] %v1360
    %1617 = vst [vmem:[#allocation5 + $0x1d0] sm:$0xff] %v1361
    %1618 = vst [vmem:[#allocation5 + $0x1d8] sm:$0xff] %v1362
    %1619 = vst [vmem:[#allocation5 + $0x1e0] sm:$0xff] %v1363
    %1620 = vst [vmem:[#allocation5 + $0x1e8] sm:$0xff] %v1364
    %1621 = vst [vmem:[#allocation5 + $0x1f0] sm:$0xff] %v1365
    %1622 = vst [vmem:[#allocation5 + $0x1f8] sm:$0xff] %v1366
    %1623 = vst [vmem:[#allocation5 + $0x200] sm:$0xff] %v1367
    %1624 = vst [vmem:[#allocation5 + $0x208] sm:$0xff] %v1368
    %1625 = vst [vmem:[#allocation5 + $0x210] sm:$0xff] %v1369
    %1626 = vst [vmem:[#allocation5 + $0x218] sm:$0xff] %v1370
    %1627 = vst [vmem:[#allocation5 + $0x220] sm:$0xff] %v1371
    %1628 = vst [vmem:[#allocation5 + $0x228] sm:$0xff] %v1372
    %1629 = vst [vmem:[#allocation5 + $0x230] sm:$0xff] %v1373
    %1630 = vst [vmem:[#allocation5 + $0x238] sm:$0xff] %v1374
    %1631 = vst [vmem:[#allocation5 + $0x240] sm:$0xff] %v1375
    %1632 = vst [vmem:[#allocation5 + $0x248] sm:$0xff] %v1376
    %1633 = vst [vmem:[#allocation5 + $0x250] sm:$0xff] %v1377
    %1634 = vst [vmem:[#allocation5 + $0x258] sm:$0xff] %v1378
    %1635 = vst [vmem:[#allocation5 + $0x260] sm:$0xff] %v1379
    %1636 = vst [vmem:[#allocation5 + $0x268] sm:$0xff] %v1380
    %1637 = vst [vmem:[#allocation5 + $0x270] sm:$0xff] %v1381
    %1638 = vst [vmem:[#allocation5 + $0x278] sm:$0xff] %v1382
    %1639 = vst [vmem:[#allocation5 + $0x280] sm:$0xff] %v1383
    %1640 = vst [vmem:[#allocation5 + $0x288] sm:$0xff] %v1384
    %1641 = vst [vmem:[#allocation5 + $0x290] sm:$0xff] %v1385
    %1642 = vst [vmem:[#allocation5 + $0x298] sm:$0xff] %v1386
    %1643 = vst [vmem:[#allocation5 + $0x2a0] sm:$0xff] %v1387
    %1644 = vst [vmem:[#allocation5 + $0x2a8] sm:$0xff] %v1388
    %1645 = vst [vmem:[#allocation5 + $0x2b0] sm:$0xff] %v1389
    %1646 = vst [vmem:[#allocation5 + $0x2b8] sm:$0xff] %v1390
    %1647 = vst [vmem:[#allocation5 + $0x2c0] sm:$0xff] %v1391
    %1648 = vst [vmem:[#allocation5 + $0x2c8] sm:$0xff] %v1392
    %1649 = vst [vmem:[#allocation5 + $0x2d0] sm:$0xff] %v1393
    %1650 = vst [vmem:[#allocation5 + $0x2d8] sm:$0xff] %v1394
    %1651 = vst [vmem:[#allocation5 + $0x2e0] sm:$0xff] %v1395
    %1652 = vst [vmem:[#allocation5 + $0x2e8] sm:$0xff] %v1396
    %1653 = vst [vmem:[#allocation5 + $0x2f0] sm:$0xff] %v1397
    %1654 = vst [vmem:[#allocation5 + $0x2f8] sm:$0xff] %v1398
    %1655 = vst [vmem:[#allocation5 + $0x300] sm:$0xff] %v1399
    %1656 = vst [vmem:[#allocation5 + $0x308] sm:$0xff] %v1400
    %1657 = vst [vmem:[#allocation5 + $0x310] sm:$0xff] %v1401
    %1658 = vst [vmem:[#allocation5 + $0x318] sm:$0xff] %v1402
    %1659 = vst [vmem:[#allocation5 + $0x320] sm:$0xff] %v1403
    %1660 = vst [vmem:[#allocation5 + $0x328] sm:$0xff] %v1404
    %1661 = vst [vmem:[#allocation5 + $0x330] sm:$0xff] %v1405
    %1662 = vst [vmem:[#allocation5 + $0x338] sm:$0xff] %v1406
    %1663 = vst [vmem:[#allocation5 + $0x340] sm:$0xff] %v1407
    %1664 = vst [vmem:[#allocation5 + $0x348] sm:$0xff] %v1408
    %1665 = vst [vmem:[#allocation5 + $0x350] sm:$0xff] %v1409
    %1666 = vst [vmem:[#allocation5 + $0x358] sm:$0xff] %v1410
    %1667 = vst [vmem:[#allocation5 + $0x360] sm:$0xff] %v1411
    %1668 = vst [vmem:[#allocation5 + $0x368] sm:$0xff] %v1412
    %1669 = vst [vmem:[#allocation5 + $0x370] sm:$0xff] %v1413
    %1670 = vst [vmem:[#allocation5 + $0x378] sm:$0xff] %v1414
    %1671 = vst [vmem:[#allocation5 + $0x380] sm:$0xff] %v1415
    %1672 = vst [vmem:[#allocation5 + $0x388] sm:$0xff] %v1416
    %1673 = vst [vmem:[#allocation5 + $0x390] sm:$0xff] %v1417
    %1674 = vst [vmem:[#allocation5 + $0x398] sm:$0xff] %v1418
    %1675 = vst [vmem:[#allocation5 + $0x3a0] sm:$0xff] %v1419
    %1676 = vst [vmem:[#allocation5 + $0x3a8] sm:$0xff] %v1420
    %1677 = vst [vmem:[#allocation5 + $0x3b0] sm:$0xff] %v1421
    %1678 = vst [vmem:[#allocation5 + $0x3b8] sm:$0xff] %v1422
    %1679 = vst [vmem:[#allocation5 + $0x3c0] sm:$0xff] %v1423
    %1680 = vst [vmem:[#allocation5 + $0x3c8] sm:$0xff] %v1424
    %1681 = vst [vmem:[#allocation5 + $0x3d0] sm:$0xff] %v1425
    %1682 = vst [vmem:[#allocation5 + $0x3d8] sm:$0xff] %v1426
    %1683 = vst [vmem:[#allocation5 + $0x3e0] sm:$0xff] %v1427
    %1684 = vst [vmem:[#allocation5 + $0x3e8] sm:$0xff] %v1428
    %1685 = vst [vmem:[#allocation5 + $0x3f0] sm:$0xff] %v1429
    %1686 = vst [vmem:[#allocation5 + $0x3f8] sm:$0xff] %v1430
    %1687 = vst [vmem:[#allocation5 + $0x400] sm:$0xff] %v1431
    %1688 = vst [vmem:[#allocation5 + $0x408] sm:$0xff] %v1432
    %1689 = vst [vmem:[#allocation5 + $0x410] sm:$0xff] %v1433
    %1690 = vst [vmem:[#allocation5 + $0x418] sm:$0xff] %v1434
    %1691 = vst [vmem:[#allocation5 + $0x420] sm:$0xff] %v1435
    %1692 = vst [vmem:[#allocation5 + $0x428] sm:$0xff] %v1436
    %1693 = vst [vmem:[#allocation5 + $0x430] sm:$0xff] %v1437
    %1694 = vst [vmem:[#allocation5 + $0x438] sm:$0xff] %v1438
    %1695 = vst [vmem:[#allocation5 + $0x440] sm:$0xff] %v1439
    %1696 = vst [vmem:[#allocation5 + $0x448] sm:$0xff] %v1440
    %1697 = vst [vmem:[#allocation5 + $0x450] sm:$0xff] %v1441
    %1698 = vst [vmem:[#allocation5 + $0x458] sm:$0xff] %v1442
    %1699 = vst [vmem:[#allocation5 + $0x460] sm:$0xff] %v1443
    %1700 = vst [vmem:[#allocation5 + $0x468] sm:$0xff] %v1444
    %1701 = vst [vmem:[#allocation5 + $0x470] sm:$0xff] %v1445
    %1702 = vst [vmem:[#allocation5 + $0x478] sm:$0xff] %v1446
    %1703 = vst [vmem:[#allocation5 + $0x480] sm:$0xff] %v1447
    %1704 = vst [vmem:[#allocation5 + $0x488] sm:$0xff] %v1448
    %1705 = vst [vmem:[#allocation5 + $0x490] sm:$0xff] %v1449
    %1706 = vst [vmem:[#allocation5 + $0x498] sm:$0xff] %v1450
    %1707 = vst [vmem:[#allocation5 + $0x4a0] sm:$0xff] %v1451
    %1708 = vst [vmem:[#allocation5 + $0x4a8] sm:$0xff] %v1452
    %1709 = vst [vmem:[#allocation5 + $0x4b0] sm:$0xff] %v1453
    %1710 = vst [vmem:[#allocation5 + $0x4b8] sm:$0xff] %v1454
    %1711 = vst [vmem:[#allocation5 + $0x4c0] sm:$0xff] %v1455
    %1712 = vst [vmem:[#allocation5 + $0x4c8] sm:$0xff] %v1456
    %1713 = vst [vmem:[#allocation5 + $0x4d0] sm:$0xff] %v1457
    %1714 = vst [vmem:[#allocation5 + $0x4d8] sm:$0xff] %v1458
    %1715 = vst [vmem:[#allocation5 + $0x4e0] sm:$0xff] %v1459
    %1716 = vst [vmem:[#allocation5 + $0x4e8] sm:$0xff] %v1460
    %1717 = vst [vmem:[#allocation5 + $0x4f0] sm:$0xff] %v1461
    %1718 = vst [vmem:[#allocation5 + $0x4f8] sm:$0xff] %v1462
    %1719 = vst [vmem:[#allocation5 + $0x500] sm:$0xff] %v1463
    %1720 = vst [vmem:[#allocation5 + $0x508] sm:$0xff] %v1464
    %1721 = vst [vmem:[#allocation5 + $0x510] sm:$0xff] %v1465
    %1722 = vst [vmem:[#allocation5 + $0x518] sm:$0xff] %v1466
    %1723 = vst [vmem:[#allocation5 + $0x520] sm:$0xff] %v1467
    %1724 = vst [vmem:[#allocation5 + $0x528] sm:$0xff] %v1468
    %1725 = vst [vmem:[#allocation5 + $0x530] sm:$0xff] %v1469
    %1726 = vst [vmem:[#allocation5 + $0x538] sm:$0xff] %v1470
    %1727 = vst [vmem:[#allocation5 + $0x540] sm:$0xff] %v1471
    %1728 = vst [vmem:[#allocation5 + $0x548] sm:$0xff] %v1472
    %1729 = vst [vmem:[#allocation5 + $0x550] sm:$0xff] %v1473
    %1730 = vst [vmem:[#allocation5 + $0x558] sm:$0xff] %v1474
    %1731 = vst [vmem:[#allocation5 + $0x560] sm:$0xff] %v1475
    %1732 = vst [vmem:[#allocation5 + $0x568] sm:$0xff] %v1476
    %1733 = vst [vmem:[#allocation5 + $0x570] sm:$0xff] %v1477
    %1734 = vst [vmem:[#allocation5 + $0x578] sm:$0xff] %v1478
    %1735 = vst [vmem:[#allocation5 + $0x580] sm:$0xff] %v1479
    %1736 = vst [vmem:[#allocation5 + $0x588] sm:$0xff] %v1480
    %1737 = vst [vmem:[#allocation5 + $0x590] sm:$0xff] %v1481
    %1738 = vst [vmem:[#allocation5 + $0x598] sm:$0xff] %v1482
    %1739 = vst [vmem:[#allocation5 + $0x5a0] sm:$0xff] %v1483
    %1740 = vst [vmem:[#allocation5 + $0x5a8] sm:$0xff] %v1484
    %1741 = vst [vmem:[#allocation5 + $0x5b0] sm:$0xff] %v1485
    %1742 = vst [vmem:[#allocation5 + $0x5b8] sm:$0xff] %v1486
    %1743 = vst [vmem:[#allocation5 + $0x5c0] sm:$0xff] %v1487
    %1744 = vst [vmem:[#allocation5 + $0x5c8] sm:$0xff] %v1488
    %1745 = vst [vmem:[#allocation5 + $0x5d0] sm:$0xff] %v1489
    %1746 = vst [vmem:[#allocation5 + $0x5d8] sm:$0xff] %v1490
    %1747 = vst [vmem:[#allocation5 + $0x5e0] sm:$0xff] %v1491
    %1748 = vst [vmem:[#allocation5 + $0x5e8] sm:$0xff] %v1492
    %1749 = vst [vmem:[#allocation5 + $0x5f0] sm:$0xff] %v1493
    %1750 = vst [vmem:[#allocation5 + $0x5f8] sm:$0xff] %v1494
    %1751 = vst [vmem:[#allocation5 + $0x600] sm:$0xff] %v1495
    %1752 = vst [vmem:[#allocation5 + $0x608] sm:$0xff] %v1496
    %1753 = vst [vmem:[#allocation5 + $0x610] sm:$0xff] %v1497
    %1754 = vst [vmem:[#allocation5 + $0x618] sm:$0xff] %v1498
    %1755 = vst [vmem:[#allocation5 + $0x620] sm:$0xff] %v1499
    %1756 = vst [vmem:[#allocation5 + $0x628] sm:$0xff] %v1500
    %1757 = vst [vmem:[#allocation5 + $0x630] sm:$0xff] %v1501
    %1758 = vst [vmem:[#allocation5 + $0x638] sm:$0xff] %v1502
    %1759 = vst [vmem:[#allocation5 + $0x640] sm:$0xff] %v1503
    %1760 = vst [vmem:[#allocation5 + $0x648] sm:$0xff] %v1504
    %1761 = vst [vmem:[#allocation5 + $0x650] sm:$0xff] %v1505
    %1762 = vst [vmem:[#allocation5 + $0x658] sm:$0xff] %v1506
    %1763 = vst [vmem:[#allocation5 + $0x660] sm:$0xff] %v1507
    %1764 = vst [vmem:[#allocation5 + $0x668] sm:$0xff] %v1508
    %1765 = vst [vmem:[#allocation5 + $0x670] sm:$0xff] %v1509
    %1766 = vst [vmem:[#allocation5 + $0x678] sm:$0xff] %v1510
    %1767 = vst [vmem:[#allocation5 + $0x680] sm:$0xff] %v1511
    %1768 = vst [vmem:[#allocation5 + $0x688] sm:$0xff] %v1512
    %1769 = vst [vmem:[#allocation5 + $0x690] sm:$0xff] %v1513
    %1770 = vst [vmem:[#allocation5 + $0x698] sm:$0xff] %v1514
    %1771 = vst [vmem:[#allocation5 + $0x6a0] sm:$0xff] %v1515
    %1772 = vst [vmem:[#allocation5 + $0x6a8] sm:$0xff] %v1516
    %1773 = vst [vmem:[#allocation5 + $0x6b0] sm:$0xff] %v1517
    %1774 = vst [vmem:[#allocation5 + $0x6b8] sm:$0xff] %v1518
    %1775 = vst [vmem:[#allocation5 + $0x6c0] sm:$0xff] %v1519
    %1776 = vst [vmem:[#allocation5 + $0x6c8] sm:$0xff] %v1520
    %1777 = vst [vmem:[#allocation5 + $0x6d0] sm:$0xff] %v1521
    %1778 = vst [vmem:[#allocation5 + $0x6d8] sm:$0xff] %v1522
    %1779 = vst [vmem:[#allocation5 + $0x6e0] sm:$0xff] %v1523
    %1780 = vst [vmem:[#allocation5 + $0x6e8] sm:$0xff] %v1524
    %1781 = vst [vmem:[#allocation5 + $0x6f0] sm:$0xff] %v1525
    %1782 = vst [vmem:[#allocation5 + $0x6f8] sm:$0xff] %v1526
    %1783 = vst [vmem:[#allocation5 + $0x700] sm:$0xff] %v1527
    %1784 = vst [vmem:[#allocation5 + $0x708] sm:$0xff] %v1528
    %1785 = vst [vmem:[#allocation5 + $0x710] sm:$0xff] %v1529
    %1786 = vst [vmem:[#allocation5 + $0x718] sm:$0xff] %v1530
    %1787 = vst [vmem:[#allocation5 + $0x720] sm:$0xff] %v1531
    %1788 = vst [vmem:[#allocation5 + $0x728] sm:$0xff] %v1532
    %1789 = vst [vmem:[#allocation5 + $0x730] sm:$0xff] %v1533
    %1790 = vst [vmem:[#allocation5 + $0x738] sm:$0xff] %v1534
    %1791 = vst [vmem:[#allocation5 + $0x740] sm:$0xff] %v1535
    %1792 = vst [vmem:[#allocation5 + $0x748] sm:$0xff] %v1536
    %1793 = vst [vmem:[#allocation5 + $0x750] sm:$0xff] %v1537
    %1794 = vst [vmem:[#allocation5 + $0x758] sm:$0xff] %v1538
    %1795 = vst [vmem:[#allocation5 + $0x760] sm:$0xff] %v1539
    %1796 = vst [vmem:[#allocation5 + $0x768] sm:$0xff] %v1540
    %1797 = vst [vmem:[#allocation5 + $0x770] sm:$0xff] %v1541
    %1798 = vst [vmem:[#allocation5 + $0x778] sm:$0xff] %v1542
    %1799 = vst [vmem:[#allocation5 + $0x780] sm:$0xff] %v1543
    %1800 = vst [vmem:[#allocation5 + $0x788] sm:$0xff] %v1544
    %1801 = vst [vmem:[#allocation5 + $0x790] sm:$0xff] %v1545
    %1802 = vst [vmem:[#allocation5 + $0x798] sm:$0xff] %v1546
    %1803 = vst [vmem:[#allocation5 + $0x7a0] sm:$0xff] %v1547
    %1804 = vst [vmem:[#allocation5 + $0x7a8] sm:$0xff] %v1548
    %1805 = vst [vmem:[#allocation5 + $0x7b0] sm:$0xff] %v1549
    %1806 = vst [vmem:[#allocation5 + $0x7b8] sm:$0xff] %v1550
    %1807 = vst [vmem:[#allocation5 + $0x7c0] sm:$0xff] %v1551
    %1808 = vst [vmem:[#allocation5 + $0x7c8] sm:$0xff] %v1552
    %1809 = vst [vmem:[#allocation5 + $0x7d0] sm:$0xff] %v1553
    %1810 = vst [vmem:[#allocation5 + $0x7d8] sm:$0xff] %v1554
    %1811 = vst [vmem:[#allocation5 + $0x7e0] sm:$0xff] %v1555
    %1812 = vst [vmem:[#allocation5 + $0x7e8] sm:$0xff] %v1556
    %1813 = vst [vmem:[#allocation5 + $0x7f0] sm:$0xff] %v1557
    %1814 = vst [vmem:[#allocation5 + $0x7f8] sm:$0xff] %v1558
    // Predicated region
    $region10: #{tpu_custom_call.1} parent=1 // pred_check
      _
    $region11: #{tpu_custom_call.1} parent=1 // pred_check_branch
      %1816 = sbr.rel (0) target = $region13
    $region12: #{tpu_custom_call.1} parent=1 // pred_region
      %s1818 = ssub.s32 32768, 32768
      %1819 = vsyncadd [#allocation4], %s1818
      %s1820 = sshll.u32 [#allocation5], 4
      %s1821 = int_to_ptr.vmem [resolvable:$true] %s1820
      %1826 = dma.vmem_to_hbm [thread:$0]  %s1821, 32768, %s1, [#allocation4], 128, 128, 8
    $region13: #{tpu_custom_call.1} parent=1 // pred_fallthru
      _
    // Predicated region
    $region14: #{tpu_custom_call.1} parent=1 // pred_check
      _
    $region15: #{tpu_custom_call.1} parent=1 // pred_check_branch
      %1828 = sbr.rel (0) target = $region17
    $region16: #{tpu_custom_call.1} parent=1 // pred_region
      %1829 = dma.done [#allocation4], 32768
    $region17: #{tpu_custom_call.1} parent=1 // pred_fallthru
      _
    %1830 = vsyncpa [#allocation3], 1
    %1831 = vsyncpa [#allocation4], 1

</llo_original>
